<compile_context>
chip_gen: v7x
topology: tpu7x:2x2x1
jax: 0.10.0
libtpu: 0.0.40
codegen_flags: <defaults>
</compile_context>

<pallas_src>
import jax
import jax.numpy as jnp
from jax.experimental import pallas as pl
from jax.experimental.pallas import tpu as pltpu


def _round_up(n, m):
    return ((n + m - 1) // m) * m


def _gru_kernel(x_ref, wih_ref, bih_ref, whh_ref, bhn_ref, wfc_ref, bfc_ref,
                out_ref, h_ref):
    """One (batch_tile, time_chunk) grid step.

    x_ref:   (Tc*Bt, I)   time-major chunk of this batch tile's inputs
    wih_ref: (I, 3Hp)     input->gates weight, gate order [r, z, n]
    bih_ref: (1, 3Hp)     folded biases [b_ir+b_hr, b_iz+b_hz, b_in]  (f32)
    whh_ref: (Hp, 3Hp)    fused recurrent weight  (single MXU dot per step)
    bhn_ref: (1, Hp)      b_hn (scaled by the reset gate, kept separate) (f32)
    wfc_ref: (Hp, Op)     fc weight;  bfc_ref: (1, Op) fc bias (f32)
    out_ref: (Bt, Op)     written only on the last time chunk
    h_ref:   (Bt, Hp)     persistent f32 hidden-state scratch
    """
    Bt, Hp = h_ref.shape
    Tc = x_ref.shape[0] // Bt
    mxu = whh_ref.dtype
    c = pl.program_id(1)

    @pl.when(c == 0)
    def _():
        # PyTorch default: h0 = 0 when h is None.
        # TODO(synk): a user-provided initial hidden state h (forward(x, h))
        # is not plumbed through; only the h=None default is implemented.
        h_ref[...] = jnp.zeros_like(h_ref)

    # ---- Hoisted input projection: ONE batched MXU matmul for the whole
    # chunk (f32 accumulation), with the foldable biases folded in.
    gi = jnp.dot(x_ref[...], wih_ref[...],
                 preferred_element_type=jnp.float32) + bih_ref[...]  # (Tc*Bt, 3Hp) f32

    # Loop-invariant loads hoisted out of the recurrence.
    whh = whh_ref[...]
    bhn = bhn_ref[...]                                               # (1, Hp)

    # ---- Recurrence: h carried in vregs (f32), ONE fused MXU dot per step,
    # gates split at 128-aligned lane offsets (Hp is a multiple of 128).
    # Statically unrolled; Tc is capped in the wrapper so code size and vreg
    # pressure stay bounded.  (Further option: keep whh resident in the MXU
    # across the chunk via pltpu.matmul_push_rhs / matmul_acc_lhs / matmul_pop.)
    h = h_ref[...]
    for t in range(Tc):
        lo = t * Bt
        gh = jnp.dot(h.astype(mxu), whh,
                     preferred_element_type=jnp.float32)             # (Bt, 3Hp) f32
        r = jax.nn.sigmoid(gi[lo:lo + Bt, 0:Hp] + gh[:, 0:Hp])
        z = jax.nn.sigmoid(gi[lo:lo + Bt, Hp:2 * Hp] + gh[:, Hp:2 * Hp])
        n = jnp.tanh(gi[lo:lo + Bt, 2 * Hp:3 * Hp]
                     + r * (gh[:, 2 * Hp:3 * Hp] + bhn))
        h = n + z * (h - n)                  # == (1 - z) * n + z * h
    h_ref[...] = h                           # single VMEM writeback per chunk

    # ---- fc head on the final hidden state, only on the last chunk.
    # Op is padded to 128 so this is a single lane-dense store.
    @pl.when(c == pl.num_programs(1) - 1)
    def _():
        out_ref[...] = (jnp.dot(h.astype(mxu), wfc_ref[...],
                                preferred_element_type=jnp.float32)
                        + bfc_ref[...]).astype(out_ref.dtype)


def _const_spec(shape):
    """BlockSpec for a grid-invariant operand, single-buffered to save VMEM."""
    index_map = lambda b, c: (0,) * len(shape)
    try:
        return pl.BlockSpec(shape, index_map, pipeline_mode=pl.Buffered(1))
    except (TypeError, AttributeError):      # older jax: default double-buffering
        return pl.BlockSpec(shape, index_map)


def _vmem_budget_bytes():
    """Per-generation VMEM budget with headroom (v7x: 64 MiB, v5e/v6e: 128 MiB)."""
    phys = 64 * 1024 * 1024                  # conservative default (v7x per-TC)
    try:
        phys = int(pltpu.get_tpu_info().vmem_capacity_bytes)
    except Exception:
        pass
    return min(int(phys * 0.75), 100 * 1024 * 1024)


def _pick_time_chunk(T, Bt, I, Hp, Op, itemsize, budget, requested):
    """Largest Tc <= cap dividing T whose working set fits the VMEM budget."""
    cap = max(1, min(T, 32 if requested is None else requested))
    fixed = ((I + Hp) * 3 * Hp + Hp * Op) * itemsize        # single-buffered weights
    fixed += (4 * Hp + Op) * 4                              # biases (f32)
    fixed += Bt * Hp * 4 + Bt * Op * 4                      # h scratch + out block
    fixed += 2 * 1024 * 1024                                # temporaries headroom
    for tc in range(cap, 0, -1):
        if T % tc:
            continue
        need = fixed + 2 * tc * Bt * I * itemsize + tc * Bt * 3 * Hp * 4
        if need <= budget:
            return tc
    return 1


def gru_forward(x, params, *, time_chunk=None, batch_tile=None,
                mxu_dtype=jnp.bfloat16):
    """x: (B, T, I) float32, batch_first (like the PyTorch module) -> (B, O).

    mxu_dtype: dtype of the MXU operands (bf16 default for ~3x MXU throughput;
      pass jnp.float32 for exact-f32 PyTorch numerics).  Accumulation and all
      gate elementwise math are always f32.
    batch_tile: optional batch-tile size; set it (e.g. B//2) on v7x to spread
      independent batch tiles across its two TensorCores.  Default: one tile.
    """
    B, T, I = x.shape
    H = params["w_hh"].shape[1]              # w_hh: (3H, H)
    O = params["w_fc"].shape[0]              # w_fc: (O, H)
    f32 = jnp.float32

    Hp = _round_up(H, 128)                   # lane-aligned hidden size
    Op = _round_up(O, 128)                   # lane-dense output
    if batch_tile is None:
        Bt = _round_up(B, 8)
    else:
        Bt = _round_up(min(batch_tile, B), 8)
    Bp = _round_up(B, Bt)
    nB = Bp // Bt

    budget = _vmem_budget_bytes()
    itemsize = jnp.dtype(mxu_dtype).itemsize
    Tc = _pick_time_chunk(T, Bt, I, Hp, Op, itemsize, budget, time_chunk)
    n_chunks = T // Tc

    # ---- Layout prep (pure JAX, fused by XLA) --------------------------------
    # x: (B, T, I) -> per-batch-tile, time-major rows: (nB, T*Bt, I).
    xp = jnp.pad(x.astype(f32), ((0, Bp - B), (0, 0), (0, 0)))
    x_arr = (xp.reshape(nB, Bt, T, I).transpose(0, 2, 1, 3)
               .reshape(nB, T * Bt, I).astype(mxu_dtype))

    w_ih, w_hh = params["w_ih"].astype(f32), params["w_hh"].astype(f32)
    b_ih, b_hh = params["b_ih"].astype(f32), params["b_hh"].astype(f32)

    # PyTorch gate order [r, z, n]; pad each gate block from H -> Hp with zeros.
    wih_t = jnp.concatenate(
        [jnp.pad(w_ih[g * H:(g + 1) * H, :].T, ((0, 0), (0, Hp - H)))
         for g in range(3)], axis=1).astype(mxu_dtype)               # (I, 3Hp)
    whh_t = jnp.concatenate(
        [jnp.pad(w_hh[g * H:(g + 1) * H, :].T, ((0, Hp - H), (0, Hp - H)))
         for g in range(3)], axis=1).astype(mxu_dtype)               # (Hp, 3Hp)

    # Fold b_hr/b_hz into the hoisted projection; b_hn stays separate because
    # it is scaled by the reset gate.
    bih_parts = [b_ih[0:H] + b_hh[0:H],
                 b_ih[H:2 * H] + b_hh[H:2 * H],
                 b_ih[2 * H:3 * H]]
    bih_comb = jnp.concatenate(
        [jnp.pad(p, (0, Hp - H)) for p in bih_parts]).reshape(1, 3 * Hp)
    bhn = jnp.pad(b_hh[2 * H:3 * H], (0, Hp - H)).reshape(1, Hp)

    wfc_t = jnp.pad(params["w_fc"].astype(f32).T,
                    ((0, Hp - H), (0, Op - O))).astype(mxu_dtype)    # (Hp, Op)
    bfc = jnp.pad(params["b_fc"].astype(f32), (0, Op - O)).reshape(1, Op)

    out = pl.pallas_call(
        _gru_kernel,
        out_shape=jax.ShapeDtypeStruct((nB, Bt, Op), f32),
        grid_spec=pltpu.PrefetchScalarGridSpec(
            num_scalar_prefetch=0,
            grid=(nB, n_chunks),
            in_specs=[
                # streamed (double-buffered) time chunk of this batch tile
                pl.BlockSpec((None, Tc * Bt, I), lambda b, c: (b, c, 0)),
                _const_spec((I, 3 * Hp)),      # wih
                _const_spec((1, 3 * Hp)),      # folded input-side biases
                _const_spec((Hp, 3 * Hp)),     # fused whh
                _const_spec((1, Hp)),          # b_hn
                _const_spec((Hp, Op)),         # wfc
                _const_spec((1, Op)),          # bfc
            ],
            out_specs=pl.BlockSpec((None, Bt, Op), lambda b, c: (b, 0, 0)),
            scratch_shapes=[pltpu.VMEM((Bt, Hp), f32)],   # persistent hidden state
        ),
        compiler_params=pltpu.CompilerParams(
            # batch tiles are independent (megacore on v7x); the time axis is a
            # sequential recurrence -> must stay "arbitrary".
            dimension_semantics=("parallel", "arbitrary"),
            vmem_limit_bytes=budget,
        ),
    )(x_arr, wih_t, bih_comb, whh_t, bhn, wfc_t, bfc)

    return out.reshape(nB * Bt, Op)[:B, :O]


def init_params(key, in_size, hidden_size, out_size):
    """Deterministic init mimicking PyTorch's uniform(-1/sqrt(H), 1/sqrt(H))."""
    ks = jax.random.split(key, 6)
    s = 1.0 / jnp.sqrt(hidden_size)
    u = lambda k, shape: jax.random.uniform(k, shape, jnp.float32, -s, s)
    return {
        "w_ih": u(ks[0], (3 * hidden_size, in_size)),
        "w_hh": u(ks[1], (3 * hidden_size, hidden_size)),
        "b_ih": u(ks[2], (3 * hidden_size,)),
        "b_hh": u(ks[3], (3 * hidden_size,)),
        "w_fc": u(ks[4], (out_size, hidden_size)),
        "b_fc": u(ks[5], (out_size,)),
    }


def gru_reference(x, params):
    """Pure-JAX reference of the PyTorch forward, for correctness check."""
    B, T, I = x.shape
    H = params["w_hh"].shape[1]
    h = jnp.zeros((B, H), jnp.float32)
    for t in range(T):
        x_t = x[:, t, :]
        gi = x_t @ params["w_ih"].T + params["b_ih"]
        gh = h @ params["w_hh"].T + params["b_hh"]
        i_r, i_z, i_n = jnp.split(gi, 3, axis=1)
        h_r, h_z, h_n = jnp.split(gh, 3, axis=1)
        r = jax.nn.sigmoid(i_r + h_r)
        z = jax.nn.sigmoid(i_z + h_z)
        n = jnp.tanh(i_n + r * h_n)
        h = (1.0 - z) * n + z * h
    return h @ params["w_fc"].T + params["b_fc"]


if __name__ == "__main__":
    B, T, IN, HID, OUT = 2, 8, 4, 32, 1

    key = jax.random.PRNGKey(0)
    k_x, k_p = jax.random.split(key)
    x = jax.random.normal(k_x, (B, T, IN), jnp.float32)
    params = init_params(k_p, IN, HID, OUT)

    ref = gru_reference(x, params)

    # f32 MXU path: bit-close to the pure-f32 PyTorch semantics.
    # time_chunk=4 -> 2 streamed chunks, exercising cross-chunk h persistence.
    out_f32 = jax.block_until_ready(
        gru_forward(x, params, time_chunk=4, mxu_dtype=jnp.float32))
    assert out_f32.shape == (B, OUT)
    assert jnp.allclose(out_f32, ref, atol=1e-5, rtol=1e-5), (out_f32, ref)

    # bf16 MXU path (default, fast): small expected drift vs. the f32 reference.
    out_bf16 = jax.block_until_ready(gru_forward(x, params, time_chunk=4))
    assert out_bf16.shape == (B, OUT)
    assert jnp.allclose(out_bf16, ref, atol=5e-2, rtol=5e-2), (out_bf16, ref)

    print("KERNEL_OK")
</pallas_src>

<mosaic_0001>
module attributes {stable_mosaic.version = 11 : i64} {
  func.func @_gru_kernel(%arg0: i32, %arg1: i32, %arg2: memref<1x32x4xf32, #tpu.memory_space<vmem>>, %arg3: memref<4x384xf32, #tpu.memory_space<vmem>>, %arg4: memref<1x384xf32, #tpu.memory_space<vmem>>, %arg5: memref<128x384xf32, #tpu.memory_space<vmem>>, %arg6: memref<1x128xf32, #tpu.memory_space<vmem>>, %arg7: memref<128x128xf32, #tpu.memory_space<vmem>>, %arg8: memref<1x128xf32, #tpu.memory_space<vmem>>, %arg9: memref<1x8x128xf32, #tpu.memory_space<vmem>>, %arg10: memref<8x128xf32, #tpu.memory_space<vmem>>) attributes {dimension_semantics = [#tpu.dimension_semantics<parallel>, #tpu.dimension_semantics<arbitrary>], iteration_bounds = array<i64: 1, 2>, scalar_prefetch = 0 : i64, scratch_operands = 1 : i64, tpu.core_type = #tpu.core_type<tc>, window_params = [{transform_indices = @transform_0, window_bounds = array<i64: 1, 32, 4>}, {pipeline_mode = #tpu.pipeline_mode<synchronous>, transform_indices = @transform_1, window_bounds = array<i64: 4, 384>}, {pipeline_mode = #tpu.pipeline_mode<synchronous>, transform_indices = @transform_2, window_bounds = array<i64: 1, 384>}, {pipeline_mode = #tpu.pipeline_mode<synchronous>, transform_indices = @transform_3, window_bounds = array<i64: 128, 384>}, {pipeline_mode = #tpu.pipeline_mode<synchronous>, transform_indices = @transform_4, window_bounds = array<i64: 1, 128>}, {pipeline_mode = #tpu.pipeline_mode<synchronous>, transform_indices = @transform_5, window_bounds = array<i64: 128, 128>}, {pipeline_mode = #tpu.pipeline_mode<synchronous>, transform_indices = @transform_6, window_bounds = array<i64: 1, 128>}, {transform_indices = @transform_7, window_bounds = array<i64: 1, 8, 128>}]} {
    %c0_i32 = arith.constant 0 : i32
    %0 = arith.cmpi eq, %arg1, %c0_i32 : i32
    %1 = arith.extui %0 : i1 to i32
    %c0_i32_0 = arith.constant 0 : i32
    %2 = arith.cmpi ne, %1, %c0_i32_0 : i32
    scf.if %2 {
      %cst_28 = arith.constant 0.000000e+00 : f32
      %125 = vector.broadcast %cst_28 : f32 to vector<8x128xf32>
      %c0_29 = arith.constant 0 : index
      %c0_30 = arith.constant 0 : index
      %126 = vector.load %arg10[%c0_29, %c0_30] : memref<8x128xf32, #tpu.memory_space<vmem>>, vector<8x128xf32>
      tpu.vector_store %arg10[%c0_29, %c0_30], %125 {strides = array<i32>} : memref<8x128xf32, #tpu.memory_space<vmem>>, vector<8x128xf32>,
    } else {
    }
    %c0 = arith.constant 0 : index
    %c0_1 = arith.constant 0 : index
    %c0_2 = arith.constant 0 : index
    %3 = vector.load %arg2[%c0, %c0_1, %c0_2] : memref<1x32x4xf32, #tpu.memory_space<vmem>>, vector<1x32x4xf32>
    %4 = vector.shape_cast %3 : vector<1x32x4xf32> to vector<32x4xf32>
    %c0_3 = arith.constant 0 : index
    %c0_4 = arith.constant 0 : index
    %5 = vector.load %arg3[%c0_3, %c0_4] : memref<4x384xf32, #tpu.memory_space<vmem>>, vector<4x384xf32>
    %cst = arith.constant dense<0.000000e+00> : vector<32x384xf32>
    %6 = tpu.matmul %4, %5, %cst {dimension_numbers = #tpu.dot_dimension_numbers<[1], [0], [0], [1], [0, 0, 1, 1], [], []>} : vector<32x4xf32>, vector<4x384xf32>, vector<32x384xf32> -> vector<32x384xf32>
    %c0_5 = arith.constant 0 : index
    %c0_6 = arith.constant 0 : index
    %7 = vector.load %arg4[%c0_5, %c0_6] : memref<1x384xf32, #tpu.memory_space<vmem>>, vector<1x384xf32>
    %8 = vector.broadcast %7 : vector<1x384xf32> to vector<32x384xf32>
    %9 = arith.addf %6, %8 : vector<32x384xf32>
    %c0_7 = arith.constant 0 : index
    %c0_8 = arith.constant 0 : index
    %10 = vector.load %arg5[%c0_7, %c0_8] : memref<128x384xf32, #tpu.memory_space<vmem>>, vector<128x384xf32>
    %c0_9 = arith.constant 0 : index
    %c0_10 = arith.constant 0 : index
    %11 = vector.load %arg6[%c0_9, %c0_10] : memref<1x128xf32, #tpu.memory_space<vmem>>, vector<1x128xf32>
    %c0_11 = arith.constant 0 : index
    %c0_12 = arith.constant 0 : index
    %12 = vector.load %arg10[%c0_11, %c0_12] : memref<8x128xf32, #tpu.memory_space<vmem>>, vector<8x128xf32>
    %cst_13 = arith.constant dense<0.000000e+00> : vector<8x384xf32>
    %13 = tpu.matmul %12, %10, %cst_13 {dimension_numbers = #tpu.dot_dimension_numbers<[1], [0], [0], [1], [0, 0, 1, 1], [], []>} : vector<8x128xf32>, vector<128x384xf32>, vector<8x384xf32> -> vector<8x384xf32>
    %14 = vector.extract_strided_slice %9 {offsets = [0, 0], sizes = [8, 128], strides = [1, 1]} : vector<32x384xf32> to vector<8x128xf32>
    %15 = vector.extract_strided_slice %13 {offsets = [0, 0], sizes = [8, 128], strides = [1, 1]} : vector<8x384xf32> to vector<8x128xf32>
    %16 = arith.addf %14, %15 : vector<8x128xf32>
    %17 = arith.negf %16 : vector<8x128xf32>
    %18 = math.exp %17 : vector<8x128xf32>
    %cst_14 = arith.constant 1.000000e+00 : f32
    %19 = vector.broadcast %cst_14 : f32 to vector<8x128xf32>
    %20 = arith.addf %19, %18 : vector<8x128xf32>
    %21 = arith.divf %19, %20 : vector<8x128xf32>
    %22 = vector.extract_strided_slice %9 {offsets = [0, 128], sizes = [8, 128], strides = [1, 1]} : vector<32x384xf32> to vector<8x128xf32>
    %23 = vector.extract_strided_slice %13 {offsets = [0, 128], sizes = [8, 128], strides = [1, 1]} : vector<8x384xf32> to vector<8x128xf32>
    %24 = arith.addf %22, %23 : vector<8x128xf32>
    %25 = arith.negf %24 : vector<8x128xf32>
    %26 = math.exp %25 : vector<8x128xf32>
    %cst_15 = arith.constant 1.000000e+00 : f32
    %27 = vector.broadcast %cst_15 : f32 to vector<8x128xf32>
    %28 = arith.addf %27, %26 : vector<8x128xf32>
    %29 = arith.divf %27, %28 : vector<8x128xf32>
    %30 = vector.extract_strided_slice %9 {offsets = [0, 256], sizes = [8, 128], strides = [1, 1]} : vector<32x384xf32> to vector<8x128xf32>
    %31 = vector.extract_strided_slice %13 {offsets = [0, 256], sizes = [8, 128], strides = [1, 1]} : vector<8x384xf32> to vector<8x128xf32>
    %32 = vector.broadcast %11 : vector<1x128xf32> to vector<8x128xf32>
    %33 = arith.addf %31, %32 : vector<8x128xf32>
    %34 = arith.mulf %21, %33 : vector<8x128xf32>
    %35 = arith.addf %30, %34 : vector<8x128xf32>
    %36 = math.tanh %35 : vector<8x128xf32>
    %37 = arith.subf %12, %36 : vector<8x128xf32>
    %38 = arith.mulf %29, %37 : vector<8x128xf32>
    %39 = arith.addf %36, %38 : vector<8x128xf32>
    %cst_16 = arith.constant dense<0.000000e+00> : vector<8x384xf32>
    %40 = tpu.matmul %39, %10, %cst_16 {dimension_numbers = #tpu.dot_dimension_numbers<[1], [0], [0], [1], [0, 0, 1, 1], [], []>} : vector<8x128xf32>, vector<128x384xf32>, vector<8x384xf32> -> vector<8x384xf32>
    %41 = vector.extract_strided_slice %9 {offsets = [8, 0], sizes = [8, 128], strides = [1, 1]} : vector<32x384xf32> to vector<8x128xf32>
    %42 = vector.extract_strided_slice %40 {offsets = [0, 0], sizes = [8, 128], strides = [1, 1]} : vector<8x384xf32> to vector<8x128xf32>
    %43 = arith.addf %41, %42 : vector<8x128xf32>
    %44 = arith.negf %43 : vector<8x128xf32>
    %45 = math.exp %44 : vector<8x128xf32>
    %cst_17 = arith.constant 1.000000e+00 : f32
    %46 = vector.broadcast %cst_17 : f32 to vector<8x128xf32>
    %47 = arith.addf %46, %45 : vector<8x128xf32>
    %48 = arith.divf %46, %47 : vector<8x128xf32>
    %49 = vector.extract_strided_slice %9 {offsets = [8, 128], sizes = [8, 128], strides = [1, 1]} : vector<32x384xf32> to vector<8x128xf32>
    %50 = vector.extract_strided_slice %40 {offsets = [0, 128], sizes = [8, 128], strides = [1, 1]} : vector<8x384xf32> to vector<8x128xf32>
    %51 = arith.addf %49, %50 : vector<8x128xf32>
    %52 = arith.negf %51 : vector<8x128xf32>
    %53 = math.exp %52 : vector<8x128xf32>
    %cst_18 = arith.constant 1.000000e+00 : f32
    %54 = vector.broadcast %cst_18 : f32 to vector<8x128xf32>
    %55 = arith.addf %54, %53 : vector<8x128xf32>
    %56 = arith.divf %54, %55 : vector<8x128xf32>
    %57 = vector.extract_strided_slice %9 {offsets = [8, 256], sizes = [8, 128], strides = [1, 1]} : vector<32x384xf32> to vector<8x128xf32>
    %58 = vector.extract_strided_slice %40 {offsets = [0, 256], sizes = [8, 128], strides = [1, 1]} : vector<8x384xf32> to vector<8x128xf32>
    %59 = vector.broadcast %11 : vector<1x128xf32> to vector<8x128xf32>
    %60 = arith.addf %58, %59 : vector<8x128xf32>
    %61 = arith.mulf %48, %60 : vector<8x128xf32>
    %62 = arith.addf %57, %61 : vector<8x128xf32>
    %63 = math.tanh %62 : vector<8x128xf32>
    %64 = arith.subf %39, %63 : vector<8x128xf32>
    %65 = arith.mulf %56, %64 : vector<8x128xf32>
    %66 = arith.addf %63, %65 : vector<8x128xf32>
    %cst_19 = arith.constant dense<0.000000e+00> : vector<8x384xf32>
    %67 = tpu.matmul %66, %10, %cst_19 {dimension_numbers = #tpu.dot_dimension_numbers<[1], [0], [0], [1], [0, 0, 1, 1], [], []>} : vector<8x128xf32>, vector<128x384xf32>, vector<8x384xf32> -> vector<8x384xf32>
    %68 = vector.extract_strided_slice %9 {offsets = [16, 0], sizes = [8, 128], strides = [1, 1]} : vector<32x384xf32> to vector<8x128xf32>
    %69 = vector.extract_strided_slice %67 {offsets = [0, 0], sizes = [8, 128], strides = [1, 1]} : vector<8x384xf32> to vector<8x128xf32>
    %70 = arith.addf %68, %69 : vector<8x128xf32>
    %71 = arith.negf %70 : vector<8x128xf32>
    %72 = math.exp %71 : vector<8x128xf32>
    %cst_20 = arith.constant 1.000000e+00 : f32
    %73 = vector.broadcast %cst_20 : f32 to vector<8x128xf32>
    %74 = arith.addf %73, %72 : vector<8x128xf32>
    %75 = arith.divf %73, %74 : vector<8x128xf32>
    %76 = vector.extract_strided_slice %9 {offsets = [16, 128], sizes = [8, 128], strides = [1, 1]} : vector<32x384xf32> to vector<8x128xf32>
    %77 = vector.extract_strided_slice %67 {offsets = [0, 128], sizes = [8, 128], strides = [1, 1]} : vector<8x384xf32> to vector<8x128xf32>
    %78 = arith.addf %76, %77 : vector<8x128xf32>
    %79 = arith.negf %78 : vector<8x128xf32>
    %80 = math.exp %79 : vector<8x128xf32>
    %cst_21 = arith.constant 1.000000e+00 : f32
    %81 = vector.broadcast %cst_21 : f32 to vector<8x128xf32>
    %82 = arith.addf %81, %80 : vector<8x128xf32>
    %83 = arith.divf %81, %82 : vector<8x128xf32>
    %84 = vector.extract_strided_slice %9 {offsets = [16, 256], sizes = [8, 128], strides = [1, 1]} : vector<32x384xf32> to vector<8x128xf32>
    %85 = vector.extract_strided_slice %67 {offsets = [0, 256], sizes = [8, 128], strides = [1, 1]} : vector<8x384xf32> to vector<8x128xf32>
    %86 = vector.broadcast %11 : vector<1x128xf32> to vector<8x128xf32>
    %87 = arith.addf %85, %86 : vector<8x128xf32>
    %88 = arith.mulf %75, %87 : vector<8x128xf32>
    %89 = arith.addf %84, %88 : vector<8x128xf32>
    %90 = math.tanh %89 : vector<8x128xf32>
    %91 = arith.subf %66, %90 : vector<8x128xf32>
    %92 = arith.mulf %83, %91 : vector<8x128xf32>
    %93 = arith.addf %90, %92 : vector<8x128xf32>
    %cst_22 = arith.constant dense<0.000000e+00> : vector<8x384xf32>
    %94 = tpu.matmul %93, %10, %cst_22 {dimension_numbers = #tpu.dot_dimension_numbers<[1], [0], [0], [1], [0, 0, 1, 1], [], []>} : vector<8x128xf32>, vector<128x384xf32>, vector<8x384xf32> -> vector<8x384xf32>
    %95 = vector.extract_strided_slice %9 {offsets = [24, 0], sizes = [8, 128], strides = [1, 1]} : vector<32x384xf32> to vector<8x128xf32>
    %96 = vector.extract_strided_slice %94 {offsets = [0, 0], sizes = [8, 128], strides = [1, 1]} : vector<8x384xf32> to vector<8x128xf32>
    %97 = arith.addf %95, %96 : vector<8x128xf32>
    %98 = arith.negf %97 : vector<8x128xf32>
    %99 = math.exp %98 : vector<8x128xf32>
    %cst_23 = arith.constant 1.000000e+00 : f32
    %100 = vector.broadcast %cst_23 : f32 to vector<8x128xf32>
    %101 = arith.addf %100, %99 : vector<8x128xf32>
    %102 = arith.divf %100, %101 : vector<8x128xf32>
    %103 = vector.extract_strided_slice %9 {offsets = [24, 128], sizes = [8, 128], strides = [1, 1]} : vector<32x384xf32> to vector<8x128xf32>
    %104 = vector.extract_strided_slice %94 {offsets = [0, 128], sizes = [8, 128], strides = [1, 1]} : vector<8x384xf32> to vector<8x128xf32>
    %105 = arith.addf %103, %104 : vector<8x128xf32>
    %106 = arith.negf %105 : vector<8x128xf32>
    %107 = math.exp %106 : vector<8x128xf32>
    %cst_24 = arith.constant 1.000000e+00 : f32
    %108 = vector.broadcast %cst_24 : f32 to vector<8x128xf32>
    %109 = arith.addf %108, %107 : vector<8x128xf32>
    %110 = arith.divf %108, %109 : vector<8x128xf32>
    %111 = vector.extract_strided_slice %9 {offsets = [24, 256], sizes = [8, 128], strides = [1, 1]} : vector<32x384xf32> to vector<8x128xf32>
    %112 = vector.extract_strided_slice %94 {offsets = [0, 256], sizes = [8, 128], strides = [1, 1]} : vector<8x384xf32> to vector<8x128xf32>
    %113 = vector.broadcast %11 : vector<1x128xf32> to vector<8x128xf32>
    %114 = arith.addf %112, %113 : vector<8x128xf32>
    %115 = arith.mulf %102, %114 : vector<8x128xf32>
    %116 = arith.addf %111, %115 : vector<8x128xf32>
    %117 = math.tanh %116 : vector<8x128xf32>
    %118 = arith.subf %93, %117 : vector<8x128xf32>
    %119 = arith.mulf %110, %118 : vector<8x128xf32>
    %120 = arith.addf %117, %119 : vector<8x128xf32>
    %c0_25 = arith.constant 0 : index
    %c0_26 = arith.constant 0 : index
    %121 = vector.load %arg10[%c0_25, %c0_26] : memref<8x128xf32, #tpu.memory_space<vmem>>, vector<8x128xf32>
    tpu.vector_store %arg10[%c0_25, %c0_26], %120 {strides = array<i32>} : memref<8x128xf32, #tpu.memory_space<vmem>>, vector<8x128xf32>,
    %c1_i32 = arith.constant 1 : i32
    %122 = arith.cmpi eq, %arg1, %c1_i32 : i32
    %123 = arith.extui %122 : i1 to i32
    %c0_i32_27 = arith.constant 0 : i32
    %124 = arith.cmpi ne, %123, %c0_i32_27 : i32
    scf.if %124 {
      %c0_28 = arith.constant 0 : index
      %c0_29 = arith.constant 0 : index
      %125 = vector.load %arg7[%c0_28, %c0_29] : memref<128x128xf32, #tpu.memory_space<vmem>>, vector<128x128xf32>
      %cst_30 = arith.constant dense<0.000000e+00> : vector<8x128xf32>
      %126 = tpu.matmul %120, %125, %cst_30 {dimension_numbers = #tpu.dot_dimension_numbers<[1], [0], [0], [1], [0, 0, 1, 1], [], []>} : vector<8x128xf32>, vector<128x128xf32>, vector<8x128xf32> -> vector<8x128xf32>
      %c0_31 = arith.constant 0 : index
      %c0_32 = arith.constant 0 : index
      %127 = vector.load %arg8[%c0_31, %c0_32] : memref<1x128xf32, #tpu.memory_space<vmem>>, vector<1x128xf32>
      %128 = vector.broadcast %127 : vector<1x128xf32> to vector<8x128xf32>
      %129 = arith.addf %126, %128 : vector<8x128xf32>
      %c0_33 = arith.constant 0 : index
      %c0_34 = arith.constant 0 : index
      %c0_35 = arith.constant 0 : index
      %130 = vector.load %arg9[%c0_33, %c0_34, %c0_35] : memref<1x8x128xf32, #tpu.memory_space<vmem>>, vector<1x8x128xf32>
      %131 = vector.shape_cast %130 : vector<1x8x128xf32> to vector<8x128xf32>
      %132 = vector.shape_cast %129 : vector<8x128xf32> to vector<1x8x128xf32>
      tpu.vector_store %arg9[%c0_33, %c0_34, %c0_35], %132 {strides = array<i32>} : memref<1x8x128xf32, #tpu.memory_space<vmem>>, vector<1x8x128xf32>,
    } else {
    }
    return
  }
  func.func @transform_0(%arg0: i32, %arg1: i32) -> (i32, i32, i32) {
    %c0_i32 = arith.constant 0 : i32
    %c0_i32_0 = arith.constant 0 : i32
    return %arg0, %arg1, %c0_i32 : i32, i32, i32
  }
  func.func @transform_1(%arg0: i32, %arg1: i32) -> (i32, i32) {
    %c0_i32 = arith.constant 0 : i32
    %c0_i32_0 = arith.constant 0 : i32
    %c0_i32_1 = arith.constant 0 : i32
    return %c0_i32, %c0_i32_0 : i32, i32
  }
  func.func @transform_2(%arg0: i32, %arg1: i32) -> (i32, i32) {
    %c0_i32 = arith.constant 0 : i32
    %c0_i32_0 = arith.constant 0 : i32
    %c0_i32_1 = arith.constant 0 : i32
    return %c0_i32, %c0_i32_0 : i32, i32
  }
  func.func @transform_3(%arg0: i32, %arg1: i32) -> (i32, i32) {
    %c0_i32 = arith.constant 0 : i32
    %c0_i32_0 = arith.constant 0 : i32
    %c0_i32_1 = arith.constant 0 : i32
    return %c0_i32, %c0_i32_0 : i32, i32
  }
  func.func @transform_4(%arg0: i32, %arg1: i32) -> (i32, i32) {
    %c0_i32 = arith.constant 0 : i32
    %c0_i32_0 = arith.constant 0 : i32
    %c0_i32_1 = arith.constant 0 : i32
    return %c0_i32, %c0_i32_0 : i32, i32
  }
  func.func @transform_5(%arg0: i32, %arg1: i32) -> (i32, i32) {
    %c0_i32 = arith.constant 0 : i32
    %c0_i32_0 = arith.constant 0 : i32
    %c0_i32_1 = arith.constant 0 : i32
    return %c0_i32, %c0_i32_0 : i32, i32
  }
  func.func @transform_6(%arg0: i32, %arg1: i32) -> (i32, i32) {
    %c0_i32 = arith.constant 0 : i32
    %c0_i32_0 = arith.constant 0 : i32
    %c0_i32_1 = arith.constant 0 : i32
    return %c0_i32, %c0_i32_0 : i32, i32
  }
  func.func @transform_7(%arg0: i32, %arg1: i32) -> (i32, i32, i32) {
    %c0_i32 = arith.constant 0 : i32
    %c0_i32_0 = arith.constant 0 : i32
    %c0_i32_1 = arith.constant 0 : i32
    return %arg0, %c0_i32, %c0_i32_0 : i32, i32, i32
  }
}

</mosaic_0001>

<llo_original>
// kernel: tpu_custom_call.1
$region0: #{tpu_custom_call.1}
  #allocation0 [shape = 'u32[]', space=smem, size = 0x4, offset = 0x4, fixed_abs, tag = 'smem constant byte address 0x4 - core index']
  #allocation1 [shape = 'u32[144,128]{1,0:T(1,128)}', space=vmem, size = 0x12000, scoped, tag = 'internal scratch']
  #allocation2 [shape = 'f32[8,128]{1,0:T(8,128)}', space=vmem, size = 0x1000, scoped, tag = 'scratch operand']
  %s0 = inlined_call_operand.vmem [shape: f32[1,64,4], index: 0, kind: input, shape index: {}]
  %s1 = inlined_call_operand.vmem [shape: f32[4,384], index: 1, kind: input, shape index: {}]
  %s2 = inlined_call_operand.vmem [shape: f32[1,384], index: 2, kind: input, shape index: {}]
  %s3 = inlined_call_operand.hbm [shape: f32[128,384], index: 3, kind: input, shape index: {}]
  %s4 = inlined_call_operand.vmem [shape: f32[1,128], index: 4, kind: input, shape index: {}]
  %s5 = inlined_call_operand.hbm [shape: f32[128,128], index: 5, kind: input, shape index: {}]
  %s6 = inlined_call_operand.vmem [shape: f32[1,128], index: 6, kind: input, shape index: {}]
  %s7 = inlined_call_operand.hbm [shape: f32[1,8,128], index: 7, kind: output, shape index: {}]
  %s8 = sld [smem:[#allocation0]]
  $region77: #{tpu_custom_call.1} parent=0
    _
  %s10 = ssub.s32 1, %s8
  %s11 = scalar_select 0, %s10, %s8
  $region1: #{tpu_custom_call.1} parent=0
    #allocation3 [shape = 'u8[196608]{0}', space=vmem, size = 0x30000, scoped, tag = 'input window, operand 3, single buffered']
    #allocation4 [shape = 's32[2]{0}', space=sflag, size = 0x8, scoped, tag = 'scoped memory for tpu_custom_call.1']
    #allocation5 [shape = 's32[2]{0}', space=sflag, size = 0x8, scoped, tag = 'scoped memory for tpu_custom_call.1']
    #allocation6 [shape = 'u8[65536]{0}', space=vmem, size = 0x10000, scoped, tag = 'input window, operand 5, single buffered']
    #allocation7 [shape = 's32[1]{0}', space=sflag, size = 0x4, scoped, tag = 'scoped memory for tpu_custom_call.1']
    #allocation8 [shape = 'u8[4096]{0}', space=vmem, size = 0x1000, scoped, tag = 'output window, operand 0, single buffered']
    %12 = vsyncpa [#allocation4], 0
    %13 = vsyncpa [#allocation7], 0
    %14 = vsyncpa [#allocation5], 0
    loop: start=0, step=1, limit=4
    $region2: #{tpu_custom_call.1} parent=1 // loop_pre_header
      _
    $region3: #{tpu_custom_call.1} parent=1 // loop_header
      %s16 = sphi 0, %s20
      %p17 = scmp.ge.s32.totalorder %s16, 4
      %s23 = sphi 0, %s35
      %s24 = sphi 0, %s31
      %s25 = sphi 0, %s23
      %s26 = sphi 0, %s24
      %s27 = sphi 0, %s25
      %s28 = sphi 0, %s26
      %s40 = sphi 0, %s42
      %s43 = sphi 0, %s40
      %s44 = sphi 0, %s43
      %s60 = sphi 0, %s44
      %s64 = sphi 0, %s64
      %s66 = sphi 0, %s64
      %s67 = sphi 0, %s66
      %s81 = sphi 0, %s67
      %s85 = sphi 0, %s85
      %s87 = sphi 0, %s85
      %s88 = sphi 0, %s87
      %s102 = sphi 0, %s88
      %s106 = sphi 0, %s106
      %s108 = sphi 0, %s106
      %s109 = sphi 0, %s108
      %s123 = sphi 0, %s109
      %s127 = sphi 0, %s127
      %s129 = sphi 0, %s127
      %s130 = sphi 0, %s129
      %s144 = sphi 0, %s130
      %s148 = sphi 0, %s148
      %s150 = sphi 0, %s148
      %s151 = sphi 0, %s150
      %s165 = sphi 0, %s151
      %s169 = sphi 0, %s169
      %s171 = sphi 0, %s169
      %s172 = sphi 0, %s171
      %s186 = sphi 0, %s172
      %s192 = sphi 0, %s194
      %s195 = sphi 0, %s192
      %s196 = sphi 0, %s195
      %s212 = sphi 0, %s196
    $region4: #{tpu_custom_call.1} parent=1 // loop_header_branch
      %19 = sbr.rel (%p17) target = $region8
    $region5: #{tpu_custom_call.1} parent=1 // loop_body
      %s21 = ssub.s32 %s16, 1
      %s22 = ssub.s32 %s16, 2
      %s29 = sadd.s32 1, %s24
      %p30 = scmp.ge.s32.totalorder %s29, 2
      %s31 = scalar_select %p30, 0, %s29
      %s32 = sadd.s32 1, %s23
      %s33 = scalar_select %p30, %s32, %s23
      %p34 = scmp.ge.s32.totalorder %s33, 1
      %s35 = scalar_select %p34, 0, %s33
      %s36 = ssub.s32 %s23, %s35
      %s37 = ssub.s32 %s24, %s31
      %s38 = sor.u32 %s36, %s37
      %p39 = scmp.eq.s32.totalorder %s38, 0
      %s41 = sadd.s32 %s40, 1
      %s42 = scalar_select %p39, %s40, %s41
      %p45 = pneg %p39
      %p46 = scmp.eq.s32.totalorder %s16, 1
      %p47 = por %p45, %p46
      %p48 = scmp.ne.s32.totalorder %s40, %s43
      %p49 = scmp.eq.s32.totalorder %s16, 0
      %p50 = por %p48, %p49
      %p51 = scmp.ne.s32.totalorder %s40, %s43
      %p52 = scmp.eq.s32.totalorder %s21, 1
      %p53 = por %p51, %p52
      %p54 = scmp.ne.s32.totalorder %s43, %s44
      %p55 = scmp.eq.s32.totalorder %s21, 0
      %p56 = por %p54, %p55
      %p57 = scmp.ne.s32.totalorder %s43, %s44
      %p58 = scmp.eq.s32.totalorder %s22, 1
      %p59 = por %p57, %p58
      %p61 = scmp.ne.s32.totalorder %s44, %s60
      %p62 = scmp.eq.s32.totalorder %s22, 0
      %p63 = por %p61, %p62
      %s65 = sadd.s32 %s64, 1
      %p68 = scmp.eq.s32.totalorder %s16, 1
      %p69 = scmp.ne.s32.totalorder %s64, %s66
      %p70 = scmp.eq.s32.totalorder %s16, 0
      %p71 = por %p69, %p70
      %p72 = scmp.ne.s32.totalorder %s64, %s66
      %p73 = scmp.eq.s32.totalorder %s21, 1
      %p74 = por %p72, %p73
      %p75 = scmp.ne.s32.totalorder %s66, %s67
      %p76 = scmp.eq.s32.totalorder %s21, 0
      %p77 = por %p75, %p76
      %p78 = scmp.ne.s32.totalorder %s66, %s67
      %p79 = scmp.eq.s32.totalorder %s22, 1
      %p80 = por %p78, %p79
      %p82 = scmp.ne.s32.totalorder %s67, %s81
      %p83 = scmp.eq.s32.totalorder %s22, 0
      %p84 = por %p82, %p83
      %s86 = sadd.s32 %s85, 1
      %p89 = scmp.eq.s32.totalorder %s16, 1
      %p90 = scmp.ne.s32.totalorder %s85, %s87
      %p91 = scmp.eq.s32.totalorder %s16, 0
      %p92 = por %p90, %p91
      %p93 = scmp.ne.s32.totalorder %s85, %s87
      %p94 = scmp.eq.s32.totalorder %s21, 1
      %p95 = por %p93, %p94
      %p96 = scmp.ne.s32.totalorder %s87, %s88
      %p97 = scmp.eq.s32.totalorder %s21, 0
      %p98 = por %p96, %p97
      %p99 = scmp.ne.s32.totalorder %s87, %s88
      %p100 = scmp.eq.s32.totalorder %s22, 1
      %p101 = por %p99, %p100
      %p103 = scmp.ne.s32.totalorder %s88, %s102
      %p104 = scmp.eq.s32.totalorder %s22, 0
      %p105 = por %p103, %p104
      %s107 = sadd.s32 %s106, 1
      %p110 = scmp.eq.s32.totalorder %s16, 1
      %p111 = scmp.ne.s32.totalorder %s106, %s108
      %p112 = scmp.eq.s32.totalorder %s16, 0
      %p113 = por %p111, %p112
      %p114 = scmp.ne.s32.totalorder %s106, %s108
      %p115 = scmp.eq.s32.totalorder %s21, 1
      %p116 = por %p114, %p115
      %p117 = scmp.ne.s32.totalorder %s108, %s109
      %p118 = scmp.eq.s32.totalorder %s21, 0
      %p119 = por %p117, %p118
      %p120 = scmp.ne.s32.totalorder %s108, %s109
      %p121 = scmp.eq.s32.totalorder %s22, 1
      %p122 = por %p120, %p121
      %p124 = scmp.ne.s32.totalorder %s109, %s123
      %p125 = scmp.eq.s32.totalorder %s22, 0
      %p126 = por %p124, %p125
      %s128 = sadd.s32 %s127, 1
      %p131 = scmp.eq.s32.totalorder %s16, 1
      %p132 = scmp.ne.s32.totalorder %s127, %s129
      %p133 = scmp.eq.s32.totalorder %s16, 0
      %p134 = por %p132, %p133
      %p135 = scmp.ne.s32.totalorder %s127, %s129
      %p136 = scmp.eq.s32.totalorder %s21, 1
      %p137 = por %p135, %p136
      %p138 = scmp.ne.s32.totalorder %s129, %s130
      %p139 = scmp.eq.s32.totalorder %s21, 0
      %p140 = por %p138, %p139
      %p141 = scmp.ne.s32.totalorder %s129, %s130
      %p142 = scmp.eq.s32.totalorder %s22, 1
      %p143 = por %p141, %p142
      %p145 = scmp.ne.s32.totalorder %s130, %s144
      %p146 = scmp.eq.s32.totalorder %s22, 0
      %p147 = por %p145, %p146
      %s149 = sadd.s32 %s148, 1
      %p152 = scmp.eq.s32.totalorder %s16, 1
      %p153 = scmp.ne.s32.totalorder %s148, %s150
      %p154 = scmp.eq.s32.totalorder %s16, 0
      %p155 = por %p153, %p154
      %p156 = scmp.ne.s32.totalorder %s148, %s150
      %p157 = scmp.eq.s32.totalorder %s21, 1
      %p158 = por %p156, %p157
      %p159 = scmp.ne.s32.totalorder %s150, %s151
      %p160 = scmp.eq.s32.totalorder %s21, 0
      %p161 = por %p159, %p160
      %p162 = scmp.ne.s32.totalorder %s150, %s151
      %p163 = scmp.eq.s32.totalorder %s22, 1
      %p164 = por %p162, %p163
      %p166 = scmp.ne.s32.totalorder %s151, %s165
      %p167 = scmp.eq.s32.totalorder %s22, 0
      %p168 = por %p166, %p167
      %s170 = sadd.s32 %s169, 1
      %p173 = scmp.eq.s32.totalorder %s16, 1
      %p174 = scmp.ne.s32.totalorder %s169, %s171
      %p175 = scmp.eq.s32.totalorder %s16, 0
      %p176 = por %p174, %p175
      %p177 = scmp.ne.s32.totalorder %s169, %s171
      %p178 = scmp.eq.s32.totalorder %s21, 1
      %p179 = por %p177, %p178
      %p180 = scmp.ne.s32.totalorder %s171, %s172
      %p181 = scmp.eq.s32.totalorder %s21, 0
      %p182 = por %p180, %p181
      %p183 = scmp.ne.s32.totalorder %s171, %s172
      %p184 = scmp.eq.s32.totalorder %s22, 1
      %p185 = por %p183, %p184
      %p187 = scmp.ne.s32.totalorder %s172, %s186
      %p188 = scmp.eq.s32.totalorder %s22, 0
      %p189 = por %p187, %p188
      %s190 = ssub.s32 %s23, %s35
      %p191 = scmp.eq.s32.totalorder %s190, 0
      %s193 = sadd.s32 %s192, 1
      %s194 = scalar_select %p191, %s192, %s193
      %p197 = pneg %p191
      %p198 = scmp.eq.s32.totalorder %s16, 1
      %p199 = por %p197, %p198
      %p200 = scmp.ne.s32.totalorder %s192, %s195
      %p201 = scmp.eq.s32.totalorder %s16, 0
      %p202 = por %p200, %p201
      %p203 = scmp.ne.s32.totalorder %s192, %s195
      %p204 = scmp.eq.s32.totalorder %s21, 1
      %p205 = por %p203, %p204
      %p206 = scmp.ne.s32.totalorder %s195, %s196
      %p207 = scmp.eq.s32.totalorder %s21, 0
      %p208 = por %p206, %p207
      %p209 = scmp.ne.s32.totalorder %s195, %s196
      %p210 = scmp.eq.s32.totalorder %s22, 1
      %p211 = por %p209, %p210
      %p213 = scmp.ne.s32.totalorder %s196, %s212
      %p214 = scmp.eq.s32.totalorder %s22, 0
      %p215 = por %p213, %p214
      %p216 = scmp.le.s32.totalorder 1, %s16
      %p217 = scmp.lt.s32.totalorder %s16, 3
      %p218 = pnand %p216, %p217
      %p219 = pneg %p218
      // Predicated region
      $region9: #{tpu_custom_call.1} parent=5 // pred_check
        _
      $region10: #{tpu_custom_call.1} parent=5 // pred_check_branch
        %221 = sbr.rel (%p218) target = $region12
      $region11: #{tpu_custom_call.1} parent=5 // pred_region
        %s222 = ssub.s32 %s16, 1
        // Predicated region
        $region13: #{tpu_custom_call.1} parent=11 // pred_check
          %p223 = pneg %p77
        $region14: #{tpu_custom_call.1} parent=11 // pred_check_branch
          %225 = sbr.rel (%p223) target = $region16
        $region15: #{tpu_custom_call.1} parent=11 // pred_region
          _
        $region16: #{tpu_custom_call.1} parent=11 // pred_fallthru
          _
        // Predicated region
        $region17: #{tpu_custom_call.1} parent=11 // pred_check
          %p226 = pneg %p98
        $region18: #{tpu_custom_call.1} parent=11 // pred_check_branch
          %228 = sbr.rel (%p226) target = $region20
        $region19: #{tpu_custom_call.1} parent=11 // pred_region
          _
        $region20: #{tpu_custom_call.1} parent=11 // pred_fallthru
          _
        // Predicated region
        $region21: #{tpu_custom_call.1} parent=11 // pred_check
          %p229 = pneg %p119
        $region22: #{tpu_custom_call.1} parent=11 // pred_check_branch
          %231 = sbr.rel (%p229) target = $region24
        $region23: #{tpu_custom_call.1} parent=11 // pred_region
          %s233 = ssub.s32 6144, 6144
          %234 = vsyncadd [#allocation4], %s233
          %s235 = sshll.u32 [#allocation3], 4
          %s236 = int_to_ptr.vmem [resolvable:$true] %s235
          %241 = dma.hbm_to_vmem [thread:$0]  %s3, 6144, %s236, [#allocation4], 384, 384, 24
        $region24: #{tpu_custom_call.1} parent=11 // pred_fallthru
          _
        // Predicated region
        $region25: #{tpu_custom_call.1} parent=11 // pred_check
          %p242 = pneg %p140
        $region26: #{tpu_custom_call.1} parent=11 // pred_check_branch
          %244 = sbr.rel (%p242) target = $region28
        $region27: #{tpu_custom_call.1} parent=11 // pred_region
          _
        $region28: #{tpu_custom_call.1} parent=11 // pred_fallthru
          _
        // Predicated region
        $region29: #{tpu_custom_call.1} parent=11 // pred_check
          %p245 = pneg %p161
        $region30: #{tpu_custom_call.1} parent=11 // pred_check_branch
          %247 = sbr.rel (%p245) target = $region32
        $region31: #{tpu_custom_call.1} parent=11 // pred_region
          %s249 = ssub.s32 2048, 2048
          %250 = vsyncadd [#allocation7], %s249
          %s251 = sshll.u32 [#allocation6], 4
          %s252 = int_to_ptr.vmem [resolvable:$true] %s251
          %257 = dma.hbm_to_vmem [thread:$0]  %s5, 2048, %s252, [#allocation7], 128, 128, 8
        $region32: #{tpu_custom_call.1} parent=11 // pred_fallthru
          _
        // Predicated region
        $region33: #{tpu_custom_call.1} parent=11 // pred_check
          %p258 = pneg %p182
        $region34: #{tpu_custom_call.1} parent=11 // pred_check_branch
          %260 = sbr.rel (%p258) target = $region36
        $region35: #{tpu_custom_call.1} parent=11 // pred_region
          _
        $region36: #{tpu_custom_call.1} parent=11 // pred_fallthru
          _
      $region12: #{tpu_custom_call.1} parent=5 // pred_fallthru
        _
      %p261 = scmp.lt.s32.totalorder %s16, 2
      // Predicated region
      $region37: #{tpu_custom_call.1} parent=5 // pred_check
        %p262 = pneg %p261
      $region38: #{tpu_custom_call.1} parent=5 // pred_check_branch
        %264 = sbr.rel (%p262) target = $region40
      $region39: #{tpu_custom_call.1} parent=5 // pred_region
        // Predicated region
        $region41: #{tpu_custom_call.1} parent=39 // pred_check
          %p265 = pneg %p50
        $region42: #{tpu_custom_call.1} parent=39 // pred_check_branch
          %267 = sbr.rel (%p265) target = $region44
        $region43: #{tpu_custom_call.1} parent=39 // pred_region
          %s268 = smul.u32 4, %s24
          %p269 = scmp.lt.s32.totalorder %s23, 0
          %s270 = scalar_select %p269, %s23, 0
          %p271 = scmp.lt.s32.totalorder %s268, 7
          %s272 = scalar_select %p271, %s268, 7
          %s273 = smul.addr %s270, 8
          %s274 = sadd.s32 %s272, %s273
          %s275 = smul.addr %s274, 8
          %s276 = scalar_lea.vmem %s0, %s275
          %s277 = smul.u32 4, %s24
        $region44: #{tpu_custom_call.1} parent=39 // pred_fallthru
          _
      $region40: #{tpu_custom_call.1} parent=5 // pred_fallthru
        _
      %p278 = scmp.le.s32.totalorder 1, %s16
      %p279 = scmp.lt.s32.totalorder %s16, 3
      %p280 = pnand %p278, %p279
      %p281 = pneg %p280
      // Predicated region
      $region45: #{tpu_custom_call.1} parent=5 // pred_check
        _
      $region46: #{tpu_custom_call.1} parent=5 // pred_check_branch
        %283 = sbr.rel (%p280) target = $region48
      $region47: #{tpu_custom_call.1} parent=5 // pred_region
        %s284 = ssub.s32 %s16, 1
        // Predicated region
        $region49: #{tpu_custom_call.1} parent=47 // pred_check
          %p285 = pneg %p119
        $region50: #{tpu_custom_call.1} parent=47 // pred_check_branch
          %287 = sbr.rel (%p285) target = $region52
        $region51: #{tpu_custom_call.1} parent=47 // pred_region
          %288 = dma.done [#allocation4], 6144
        $region52: #{tpu_custom_call.1} parent=47 // pred_fallthru
          _
        // Predicated region
        $region53: #{tpu_custom_call.1} parent=47 // pred_check
          %p289 = pneg %p161
        $region54: #{tpu_custom_call.1} parent=47 // pred_check_branch
          %291 = sbr.rel (%p289) target = $region56
        $region55: #{tpu_custom_call.1} parent=47 // pred_region
          %292 = dma.done [#allocation7], 2048
        $region56: #{tpu_custom_call.1} parent=47 // pred_fallthru
          _
        %s293 = smul.u32 4, %s26
        %p294 = scmp.lt.s32.totalorder %s25, 0
        %s295 = scalar_select %p294, %s25, 0
        %p296 = scmp.lt.s32.totalorder %s293, 7
        %s297 = scalar_select %p296, %s293, 7
        %s298 = smul.addr %s295, 8
        %s299 = sadd.s32 %s297, %s298
        %s300 = smul.addr %s299, 8
        %s301 = scalar_lea.vmem %s0, %s300
        %p302 = pneg %p56
        %p303 = pneg %p53
        %p304 = pneg %p77
        %p305 = pneg %p74
        %p306 = pneg %p98
        %p307 = pneg %p95
        %p308 = pneg %p119
        %p309 = pneg %p116
        %p310 = pneg %p140
        %p311 = pneg %p137
        %p312 = pneg %p161
        %p313 = pneg %p158
        %p314 = pneg %p182
        %p315 = pneg %p179
        %p316 = pneg %p208
        %p317 = pneg %p205
        %s318 = smul.u32 4, %s26
        %p319 = scmp.lt.s32.totalorder %s25, 0
        %s320 = scalar_select %p319, %s25, 0
        %p321 = scmp.lt.s32.totalorder %s318, 7
        %s322 = scalar_select %p321, %s318, 7
        %s323 = smul.addr %s320, 8
        %s324 = sadd.s32 %s322, %s323
        %s325 = smul.addr %s324, 8
        %s326 = scalar_lea.vmem %s0, %s325
        %s327 = smul.u32 4, %s26
        %p328 = scmp.eq.s32.totalorder %s26, 0
        // Predicated region
        $region57: #{tpu_custom_call.1} parent=47 // pred_check
          %p329 = pneg %p328
        $region58: #{tpu_custom_call.1} parent=47 // pred_check_branch
          %331 = sbr.rel (%p329) target = $region60
        $region59: #{tpu_custom_call.1} parent=47 // pred_region
          %332 = vst [vmem:[#allocation2] sm:$0xff] 0.0
        $region60: #{tpu_custom_call.1} parent=47 // pred_fallthru
          _
        %v333 = vld [vmem:[%s326] sm:$0xff]
        %v334 = vld [vmem:[%s326 + $0x8] sm:$0xff]
        %v335 = vld [vmem:[%s326 + $0x10] sm:$0xff]
        %v336 = vld [vmem:[%s326 + $0x18] sm:$0xff]
        %v337 = vld [vmem:[%s1] sm:$0xff]
        %v338 = vld [vmem:[%s1 + $0x8] sm:$0xf]
        %v339 = vld [vmem:[%s2] sm:$0x7]
        %v341 = vlaneseq
        %v342 = vshrl.u32 %v341, 7
        %v343 = vsub.s32 0, %v342
        %v344 = vrot.slane %v339, %v343
        %v345 = vlaneseq
        %v346 = vshrl.u32 %v345, 7
        %v347 = vsub.s32 1, %v346
        %v348 = vrot.slane %v339, %v347
        %v349 = vlaneseq
        %v350 = vshrl.u32 %v349, 7
        %v351 = vsub.s32 2, %v350
        %v352 = vrot.slane %v339, %v351
        %v358 = vcombine.high %v337, %v337
        %vm359 = vcmask 31744
        %v361 = vsel %vm359, %v333, 0
        %v364 = vsel %vm359, %v334, 0
        %v367 = vsel %vm359, %v335, 0
        %v370 = vsel %vm359, %v336, 0
        %vm372 = vcmask 1043456
        %v373 = vsel %vm372, %v337, 0
        %v375 = vsel %vm372, %v358, 0
        %v377 = vsel %vm372, %v338, 0
        %379 = vmatprep.subr.mxu0 %v375
        %380 = vmatpush1.msra.mxu0 %v373
        %381 = vmatprep.subr.mxu0 0.0
        %382 = vmatpush1.msra.mxu0 0.0
        %383 = vmatprep.subr.mxu0 0.0
        %384 = vmatpush1.msra.mxu0 0.0
        %385 = vmatprep.subr.mxu0 0.0
        %386 = vmatpush1.msra.mxu0 0.0
        %387 = vmatprep.subr.mxu0 0.0
        %388 = vmatpush1.msra.mxu0 0.0
        %389 = vmatprep.subr.mxu0 0.0
        %390 = vmatpush1.msra.mxu0 0.0
        %391 = vmatprep.subr.mxu0 0.0
        %392 = vmatpush1.msra.mxu0 0.0
        %393 = vmatprep.subr.mxu0 0.0
        %394 = vmatpush1.msra.mxu0 0.0
        %395 = vmatprep.subr.mxu0 0.0
        %396 = vmatpush1.msra.mxu0 0.0
        %397 = vmatprep.subr.mxu0 0.0
        %398 = vmatpush1.msra.mxu0 0.0
        %399 = vmatprep.subr.mxu0 0.0
        %400 = vmatpush1.msra.mxu0 0.0
        %401 = vmatprep.subr.mxu0 0.0
        %402 = vmatpush1.msra.mxu0 0.0
        %403 = vmatprep.subr.mxu0 0.0
        %404 = vmatpush1.msra.mxu0 0.0
        %405 = vmatprep.subr.mxu0 0.0
        %406 = vmatpush1.msra.mxu0 0.0
        %407 = vmatprep.subr.mxu0 0.0
        %408 = vmatpush1.msra.mxu0 0.0
        %409 = vmatprep.subr.mxu0 0.0
        %410 = vmatpush1.msra.mxu0 0.0
        %411 = vmatprep.subr.mxu0 0.0
        %412 = vmatpush1.msra.mxu0 0.0
        %413 = vmatprep.subr.mxu0 0.0
        %414 = vmatpush1.msra.mxu0 0.0
        %415 = vmatprep.subr.mxu0 0.0
        %416 = vmatpush1.msra.mxu0 0.0
        %417 = vmatprep.subr.mxu0 0.0
        %418 = vmatpush1.msra.mxu0 0.0
        %419 = vmatprep.subr.mxu0 0.0
        %420 = vmatpush1.msra.mxu0 0.0
        %421 = vmatprep.subr.mxu0 0.0
        %422 = vmatpush1.msra.mxu0 0.0
        %423 = vmatprep.subr.mxu0 0.0
        %424 = vmatpush1.msra.mxu0 0.0
        %425 = vmatprep.subr.mxu0 0.0
        %426 = vmatpush1.msra.mxu0 0.0
        %427 = vmatprep.subr.mxu0 0.0
        %428 = vmatpush1.msra.mxu0 0.0
        %429 = vmatprep.subr.mxu0 0.0
        %430 = vmatpush1.msra.mxu0 0.0
        %431 = vmatprep.subr.mxu0 0.0
        %432 = vmatpush1.msra.mxu0 0.0
        %433 = vmatprep.subr.mxu0 0.0
        %434 = vmatpush1.msra.mxu0 0.0
        %435 = vmatprep.subr.mxu0 0.0
        %436 = vmatpush1.msra.mxu0 0.0
        %437 = vmatprep.subr.mxu0 0.0
        %438 = vmatpush1.msra.mxu0 0.0
        %439 = vmatprep.subr.mxu0 0.0
        %440 = vmatpush1.msra.mxu0 0.0
        %441 = vmatprep.subr.mxu0 0.0
        %442 = vmatpush1.msra.mxu0 0.0
        %443 = vmatprep.mubr.f32.mxu0 0.0
        %444 = vmatmul.mubr.f32.gmra.mrb[0].mxu0 %v361
        %v445 = vpop.f32.mrb[0].mxu0
        %v446 = vadd.f32 %v344, %v445
        %v447 = vpop.f32.mrb[0].mxu0
        %v448 = vadd.f32 %v348, %v447
        %449 = vmatprep.mubr.f32.mxu0 0.0
        %450 = vmatmul.mubr.f32.gmra.mrb[0].mxu0 %v364
        %v451 = vpop.f32.mrb[0].mxu0
        %v452 = vadd.f32 %v344, %v451
        %v453 = vpop.f32.mrb[0].mxu0
        %v454 = vadd.f32 %v348, %v453
        %455 = vmatprep.mubr.f32.mxu0 0.0
        %456 = vmatmul.mubr.f32.gmra.mrb[0].mxu0 %v367
        %v457 = vpop.f32.mrb[0].mxu0
        %v458 = vadd.f32 %v344, %v457
        %v459 = vpop.f32.mrb[0].mxu0
        %v460 = vadd.f32 %v348, %v459
        %461 = vmatprep.mubr.f32.mxu0 0.0
        %462 = vmatmul.mubr.f32.gmra.mrb[0].mxu0 %v370
        %v463 = vpop.f32.mrb[0].mxu0
        %v464 = vadd.f32 %v344, %v463
        %v465 = vpop.f32.mrb[0].mxu0
        %v466 = vadd.f32 %v348, %v465
        %467 = vdwg.mxu0
        %468 = vmatprep.subr.mxu0 0.0
        %469 = vmatpush1.msra.mxu0 %v377
        %470 = vmatprep.subr.mxu0 0.0
        %471 = vmatpush1.msra.mxu0 0.0
        %472 = vmatprep.subr.mxu0 0.0
        %473 = vmatpush1.msra.mxu0 0.0
        %474 = vmatprep.subr.mxu0 0.0
        %475 = vmatpush1.msra.mxu0 0.0
        %476 = vmatprep.subr.mxu0 0.0
        %477 = vmatpush1.msra.mxu0 0.0
        %478 = vmatprep.subr.mxu0 0.0
        %479 = vmatpush1.msra.mxu0 0.0
        %480 = vmatprep.subr.mxu0 0.0
        %481 = vmatpush1.msra.mxu0 0.0
        %482 = vmatprep.subr.mxu0 0.0
        %483 = vmatpush1.msra.mxu0 0.0
        %484 = vmatprep.subr.mxu0 0.0
        %485 = vmatpush1.msra.mxu0 0.0
        %486 = vmatprep.subr.mxu0 0.0
        %487 = vmatpush1.msra.mxu0 0.0
        %488 = vmatprep.subr.mxu0 0.0
        %489 = vmatpush1.msra.mxu0 0.0
        %490 = vmatprep.subr.mxu0 0.0
        %491 = vmatpush1.msra.mxu0 0.0
        %492 = vmatprep.subr.mxu0 0.0
        %493 = vmatpush1.msra.mxu0 0.0
        %494 = vmatprep.subr.mxu0 0.0
        %495 = vmatpush1.msra.mxu0 0.0
        %496 = vmatprep.subr.mxu0 0.0
        %497 = vmatpush1.msra.mxu0 0.0
        %498 = vmatprep.subr.mxu0 0.0
        %499 = vmatpush1.msra.mxu0 0.0
        %500 = vmatprep.subr.mxu0 0.0
        %501 = vmatpush1.msra.mxu0 0.0
        %502 = vmatprep.subr.mxu0 0.0
        %503 = vmatpush1.msra.mxu0 0.0
        %504 = vmatprep.subr.mxu0 0.0
        %505 = vmatpush1.msra.mxu0 0.0
        %506 = vmatprep.subr.mxu0 0.0
        %507 = vmatpush1.msra.mxu0 0.0
        %508 = vmatprep.subr.mxu0 0.0
        %509 = vmatpush1.msra.mxu0 0.0
        %510 = vmatprep.subr.mxu0 0.0
        %511 = vmatpush1.msra.mxu0 0.0
        %512 = vmatprep.subr.mxu0 0.0
        %513 = vmatpush1.msra.mxu0 0.0
        %514 = vmatprep.subr.mxu0 0.0
        %515 = vmatpush1.msra.mxu0 0.0
        %516 = vmatprep.subr.mxu0 0.0
        %517 = vmatpush1.msra.mxu0 0.0
        %518 = vmatprep.subr.mxu0 0.0
        %519 = vmatpush1.msra.mxu0 0.0
        %520 = vmatprep.subr.mxu0 0.0
        %521 = vmatpush1.msra.mxu0 0.0
        %522 = vmatprep.subr.mxu0 0.0
        %523 = vmatpush1.msra.mxu0 0.0
        %524 = vmatprep.subr.mxu0 0.0
        %525 = vmatpush1.msra.mxu0 0.0
        %526 = vmatprep.subr.mxu0 0.0
        %527 = vmatpush1.msra.mxu0 0.0
        %528 = vmatprep.subr.mxu0 0.0
        %529 = vmatpush1.msra.mxu0 0.0
        %530 = vmatprep.subr.mxu0 0.0
        %531 = vmatpush1.msra.mxu0 0.0
        %532 = vmatprep.mubr.f32.mxu0 0.0
        %533 = vmatmul.mubr.f32.gmra.mrb[0].mxu0 %v361
        %v534 = vpop.f32.mrb[0].mxu0
        %v535 = vadd.f32 %v352, %v534
        %v536 = vpop.f32.mrb[0].mxu0
        %537 = vmatprep.mubr.f32.mxu0 0.0
        %538 = vmatmul.mubr.f32.gmra.mrb[0].mxu0 %v364
        %v539 = vpop.f32.mrb[0].mxu0
        %v540 = vadd.f32 %v352, %v539
        %v541 = vpop.f32.mrb[0].mxu0
        %542 = vmatprep.mubr.f32.mxu0 0.0
        %543 = vmatmul.mubr.f32.gmra.mrb[0].mxu0 %v367
        %v544 = vpop.f32.mrb[0].mxu0
        %v545 = vadd.f32 %v352, %v544
        %v546 = vpop.f32.mrb[0].mxu0
        %547 = vmatprep.mubr.f32.mxu0 0.0
        %548 = vmatmul.mubr.f32.gmra.mrb[0].mxu0 %v370
        %v549 = vpop.f32.mrb[0].mxu0
        %v550 = vadd.f32 %v352, %v549
        %v551 = vpop.f32.mrb[0].mxu0
        %552 = vdwg.mxu0
        %v553 = vld [vmem:[#allocation3] sm:$0xff]
        %v554 = vld [vmem:[#allocation3 + $0x8] sm:$0xff]
        %v555 = vld [vmem:[#allocation3 + $0x10] sm:$0xff]
        %v556 = vld [vmem:[#allocation3 + $0x18] sm:$0xff]
        %v557 = vld [vmem:[#allocation3 + $0x20] sm:$0xff]
        %v558 = vld [vmem:[#allocation3 + $0x28] sm:$0xff]
        %v559 = vld [vmem:[#allocation3 + $0x30] sm:$0xff]
        %v560 = vld [vmem:[#allocation3 + $0x38] sm:$0xff]
        %v561 = vld [vmem:[#allocation3 + $0x40] sm:$0xff]
        %v562 = vld [vmem:[#allocation3 + $0x48] sm:$0xff]
        %v563 = vld [vmem:[#allocation3 + $0x50] sm:$0xff]
        %v564 = vld [vmem:[#allocation3 + $0x58] sm:$0xff]
        %v565 = vld [vmem:[#allocation3 + $0x60] sm:$0xff]
        %v566 = vld [vmem:[#allocation3 + $0x68] sm:$0xff]
        %v567 = vld [vmem:[#allocation3 + $0x70] sm:$0xff]
        %v568 = vld [vmem:[#allocation3 + $0x78] sm:$0xff]
        %v569 = vld [vmem:[#allocation3 + $0x80] sm:$0xff]
        %v570 = vld [vmem:[#allocation3 + $0x88] sm:$0xff]
        %v571 = vld [vmem:[#allocation3 + $0x90] sm:$0xff]
        %v572 = vld [vmem:[#allocation3 + $0x98] sm:$0xff]
        %v573 = vld [vmem:[#allocation3 + $0xa0] sm:$0xff]
        %v574 = vld [vmem:[#allocation3 + $0xa8] sm:$0xff]
        %v575 = vld [vmem:[#allocation3 + $0xb0] sm:$0xff]
        %v576 = vld [vmem:[#allocation3 + $0xb8] sm:$0xff]
        %v577 = vld [vmem:[#allocation3 + $0xc0] sm:$0xff]
        %v578 = vld [vmem:[#allocation3 + $0xc8] sm:$0xff]
        %v579 = vld [vmem:[#allocation3 + $0xd0] sm:$0xff]
        %v580 = vld [vmem:[#allocation3 + $0xd8] sm:$0xff]
        %v581 = vld [vmem:[#allocation3 + $0xe0] sm:$0xff]
        %v582 = vld [vmem:[#allocation3 + $0xe8] sm:$0xff]
        %v583 = vld [vmem:[#allocation3 + $0xf0] sm:$0xff]
        %v584 = vld [vmem:[#allocation3 + $0xf8] sm:$0xff]
        %v585 = vld [vmem:[#allocation3 + $0x100] sm:$0xff]
        %v586 = vld [vmem:[#allocation3 + $0x108] sm:$0xff]
        %v587 = vld [vmem:[#allocation3 + $0x110] sm:$0xff]
        %v588 = vld [vmem:[#allocation3 + $0x118] sm:$0xff]
        %v589 = vld [vmem:[#allocation3 + $0x120] sm:$0xff]
        %v590 = vld [vmem:[#allocation3 + $0x128] sm:$0xff]
        %v591 = vld [vmem:[#allocation3 + $0x130] sm:$0xff]
        %v592 = vld [vmem:[#allocation3 + $0x138] sm:$0xff]
        %v593 = vld [vmem:[#allocation3 + $0x140] sm:$0xff]
        %v594 = vld [vmem:[#allocation3 + $0x148] sm:$0xff]
        %v595 = vld [vmem:[#allocation3 + $0x150] sm:$0xff]
        %v596 = vld [vmem:[#allocation3 + $0x158] sm:$0xff]
        %v597 = vld [vmem:[#allocation3 + $0x160] sm:$0xff]
        %v598 = vld [vmem:[#allocation3 + $0x168] sm:$0xff]
        %v599 = vld [vmem:[#allocation3 + $0x170] sm:$0xff]
        %v600 = vld [vmem:[#allocation3 + $0x178] sm:$0xff]
        %v601 = vld [vmem:[%s4] sm:$0x1]
        %v602 = vld [vmem:[#allocation2] sm:$0xff]
        %603 = vmatprep.subr.mxu0 %v554
        %604 = vmatpush1.msra.mxu0 %v553
        %605 = vmatprep.subr.mxu0 %v557
        %606 = vmatpush1.msra.mxu0 %v556
        %607 = vmatprep.subr.mxu0 %v560
        %608 = vmatpush1.msra.mxu0 %v559
        %609 = vmatprep.subr.mxu0 %v563
        %610 = vmatpush1.msra.mxu0 %v562
        %611 = vmatprep.subr.mxu0 %v566
        %612 = vmatpush1.msra.mxu0 %v565
        %613 = vmatprep.subr.mxu0 %v569
        %614 = vmatpush1.msra.mxu0 %v568
        %615 = vmatprep.subr.mxu0 %v572
        %616 = vmatpush1.msra.mxu0 %v571
        %617 = vmatprep.subr.mxu0 %v575
        %618 = vmatpush1.msra.mxu0 %v574
        %619 = vmatprep.subr.mxu0 %v578
        %620 = vmatpush1.msra.mxu0 %v577
        %621 = vmatprep.subr.mxu0 %v581
        %622 = vmatpush1.msra.mxu0 %v580
        %623 = vmatprep.subr.mxu0 %v584
        %624 = vmatpush1.msra.mxu0 %v583
        %625 = vmatprep.subr.mxu0 %v587
        %626 = vmatpush1.msra.mxu0 %v586
        %627 = vmatprep.subr.mxu0 %v590
        %628 = vmatpush1.msra.mxu0 %v589
        %629 = vmatprep.subr.mxu0 %v593
        %630 = vmatpush1.msra.mxu0 %v592
        %631 = vmatprep.subr.mxu0 %v596
        %632 = vmatpush1.msra.mxu0 %v595
        %633 = vmatprep.subr.mxu0 %v599
        %634 = vmatpush1.msra.mxu0 %v598
        %635 = vmatprep.subr.mxu0 0.0
        %636 = vmatpush1.msra.mxu0 0.0
        %637 = vmatprep.subr.mxu0 0.0
        %638 = vmatpush1.msra.mxu0 0.0
        %639 = vmatprep.subr.mxu0 0.0
        %640 = vmatpush1.msra.mxu0 0.0
        %641 = vmatprep.subr.mxu0 0.0
        %642 = vmatpush1.msra.mxu0 0.0
        %643 = vmatprep.subr.mxu0 0.0
        %644 = vmatpush1.msra.mxu0 0.0
        %645 = vmatprep.subr.mxu0 0.0
        %646 = vmatpush1.msra.mxu0 0.0
        %647 = vmatprep.subr.mxu0 0.0
        %648 = vmatpush1.msra.mxu0 0.0
        %649 = vmatprep.subr.mxu0 0.0
        %650 = vmatpush1.msra.mxu0 0.0
        %651 = vmatprep.subr.mxu0 0.0
        %652 = vmatpush1.msra.mxu0 0.0
        %653 = vmatprep.subr.mxu0 0.0
        %654 = vmatpush1.msra.mxu0 0.0
        %655 = vmatprep.subr.mxu0 0.0
        %656 = vmatpush1.msra.mxu0 0.0
        %657 = vmatprep.subr.mxu0 0.0
        %658 = vmatpush1.msra.mxu0 0.0
        %659 = vmatprep.subr.mxu0 0.0
        %660 = vmatpush1.msra.mxu0 0.0
        %661 = vmatprep.subr.mxu0 0.0
        %662 = vmatpush1.msra.mxu0 0.0
        %663 = vmatprep.subr.mxu0 0.0
        %664 = vmatpush1.msra.mxu0 0.0
        %665 = vmatprep.subr.mxu0 0.0
        %666 = vmatpush1.msra.mxu0 0.0
        %667 = vmatprep.mubr.f32.mxu0 0.0
        %668 = vmatmul.mubr.f32.gmra.mrb[0].mxu0 %v602
        %v669 = vpop.f32.mrb[0].mxu0
        %v670 = vadd.f32 0.0, %v669
        %v671 = vpop.f32.mrb[0].mxu0
        %v672 = vadd.f32 0.0, %v671
        %673 = vdwg.mxu0
        %674 = vmatprep.subr.mxu0 0.0
        %675 = vmatpush1.msra.mxu0 %v555
        %676 = vmatprep.subr.mxu0 0.0
        %677 = vmatpush1.msra.mxu0 %v558
        %678 = vmatprep.subr.mxu0 0.0
        %679 = vmatpush1.msra.mxu0 %v561
        %680 = vmatprep.subr.mxu0 0.0
        %681 = vmatpush1.msra.mxu0 %v564
        %682 = vmatprep.subr.mxu0 0.0
        %683 = vmatpush1.msra.mxu0 %v567
        %684 = vmatprep.subr.mxu0 0.0
        %685 = vmatpush1.msra.mxu0 %v570
        %686 = vmatprep.subr.mxu0 0.0
        %687 = vmatpush1.msra.mxu0 %v573
        %688 = vmatprep.subr.mxu0 0.0
        %689 = vmatpush1.msra.mxu0 %v576
        %690 = vmatprep.subr.mxu0 0.0
        %691 = vmatpush1.msra.mxu0 %v579
        %692 = vmatprep.subr.mxu0 0.0
        %693 = vmatpush1.msra.mxu0 %v582
        %694 = vmatprep.subr.mxu0 0.0
        %695 = vmatpush1.msra.mxu0 %v585
        %696 = vmatprep.subr.mxu0 0.0
        %697 = vmatpush1.msra.mxu0 %v588
        %698 = vmatprep.subr.mxu0 0.0
        %699 = vmatpush1.msra.mxu0 %v591
        %700 = vmatprep.subr.mxu0 0.0
        %701 = vmatpush1.msra.mxu0 %v594
        %702 = vmatprep.subr.mxu0 0.0
        %703 = vmatpush1.msra.mxu0 %v597
        %704 = vmatprep.subr.mxu0 0.0
        %705 = vmatpush1.msra.mxu0 %v600
        %706 = vmatprep.subr.mxu0 0.0
        %707 = vmatpush1.msra.mxu0 0.0
        %708 = vmatprep.subr.mxu0 0.0
        %709 = vmatpush1.msra.mxu0 0.0
        %710 = vmatprep.subr.mxu0 0.0
        %711 = vmatpush1.msra.mxu0 0.0
        %712 = vmatprep.subr.mxu0 0.0
        %713 = vmatpush1.msra.mxu0 0.0
        %714 = vmatprep.subr.mxu0 0.0
        %715 = vmatpush1.msra.mxu0 0.0
        %716 = vmatprep.subr.mxu0 0.0
        %717 = vmatpush1.msra.mxu0 0.0
        %718 = vmatprep.subr.mxu0 0.0
        %719 = vmatpush1.msra.mxu0 0.0
        %720 = vmatprep.subr.mxu0 0.0
        %721 = vmatpush1.msra.mxu0 0.0
        %722 = vmatprep.subr.mxu0 0.0
        %723 = vmatpush1.msra.mxu0 0.0
        %724 = vmatprep.subr.mxu0 0.0
        %725 = vmatpush1.msra.mxu0 0.0
        %726 = vmatprep.subr.mxu0 0.0
        %727 = vmatpush1.msra.mxu0 0.0
        %728 = vmatprep.subr.mxu0 0.0
        %729 = vmatpush1.msra.mxu0 0.0
        %730 = vmatprep.subr.mxu0 0.0
        %731 = vmatpush1.msra.mxu0 0.0
        %732 = vmatprep.subr.mxu0 0.0
        %733 = vmatpush1.msra.mxu0 0.0
        %734 = vmatprep.subr.mxu0 0.0
        %735 = vmatpush1.msra.mxu0 0.0
        %736 = vmatprep.subr.mxu0 0.0
        %737 = vmatpush1.msra.mxu0 0.0
        %738 = vmatprep.mubr.f32.mxu0 0.0
        %739 = vmatmul.mubr.f32.gmra.mrb[0].mxu0 %v602
        %v740 = vpop.f32.mrb[0].mxu0
        %v741 = vadd.f32 0.0, %v740
        %v742 = vpop.f32.mrb[0].mxu0
        %743 = vdwg.mxu0
        %v744 = vadd.f32 %v446, %v670
        %v745 = vxor.u32 %v744, 2147483648
        %v746 = vmul.f32 %v745, 1.442695
        %v747 = vpow.pop %v746
        %v748 = vadd.f32 %v747, 1.0
        %v749 = vrcp.pop %v748
        %v750 = vmul.f32 1.0, %v749
        %v751 = vadd.f32 %v448, %v672
        %v752 = vxor.u32 %v751, 2147483648
        %v753 = vmul.f32 %v752, 1.442695
        %v754 = vpow.pop %v753
        %v755 = vadd.f32 %v754, 1.0
        %v756 = vrcp.pop %v755
        %v757 = vmul.f32 1.0, %v756
        %v759 = vlaneseq
        %v760 = vshrl.u32 %v759, 7
        %v761 = vsub.s32 0, %v760
        %v762 = vrot.slane %v601, %v761
        %v764 = vadd.f32 %v741, %v762
        %v765 = vmul.f32 %v750, %v764
        %v766 = vadd.f32 %v535, %v765
        %v767 = vtanh.pop %v766
        %v768 = vsub.f32 %v602, %v767
        %v769 = vmul.f32 %v757, %v768
        %v770 = vadd.f32 %v767, %v769
        %771 = vmatprep.subr.mxu0 %v554
        %772 = vmatpush1.msra.mxu0 %v553
        %773 = vmatprep.subr.mxu0 %v557
        %774 = vmatpush1.msra.mxu0 %v556
        %775 = vmatprep.subr.mxu0 %v560
        %776 = vmatpush1.msra.mxu0 %v559
        %777 = vmatprep.subr.mxu0 %v563
        %778 = vmatpush1.msra.mxu0 %v562
        %779 = vmatprep.subr.mxu0 %v566
        %780 = vmatpush1.msra.mxu0 %v565
        %781 = vmatprep.subr.mxu0 %v569
        %782 = vmatpush1.msra.mxu0 %v568
        %783 = vmatprep.subr.mxu0 %v572
        %784 = vmatpush1.msra.mxu0 %v571
        %785 = vmatprep.subr.mxu0 %v575
        %786 = vmatpush1.msra.mxu0 %v574
        %787 = vmatprep.subr.mxu0 %v578
        %788 = vmatpush1.msra.mxu0 %v577
        %789 = vmatprep.subr.mxu0 %v581
        %790 = vmatpush1.msra.mxu0 %v580
        %791 = vmatprep.subr.mxu0 %v584
        %792 = vmatpush1.msra.mxu0 %v583
        %793 = vmatprep.subr.mxu0 %v587
        %794 = vmatpush1.msra.mxu0 %v586
        %795 = vmatprep.subr.mxu0 %v590
        %796 = vmatpush1.msra.mxu0 %v589
        %797 = vmatprep.subr.mxu0 %v593
        %798 = vmatpush1.msra.mxu0 %v592
        %799 = vmatprep.subr.mxu0 %v596
        %800 = vmatpush1.msra.mxu0 %v595
        %801 = vmatprep.subr.mxu0 %v599
        %802 = vmatpush1.msra.mxu0 %v598
        %803 = vmatprep.subr.mxu0 0.0
        %804 = vmatpush1.msra.mxu0 0.0
        %805 = vmatprep.subr.mxu0 0.0
        %806 = vmatpush1.msra.mxu0 0.0
        %807 = vmatprep.subr.mxu0 0.0
        %808 = vmatpush1.msra.mxu0 0.0
        %809 = vmatprep.subr.mxu0 0.0
        %810 = vmatpush1.msra.mxu0 0.0
        %811 = vmatprep.subr.mxu0 0.0
        %812 = vmatpush1.msra.mxu0 0.0
        %813 = vmatprep.subr.mxu0 0.0
        %814 = vmatpush1.msra.mxu0 0.0
        %815 = vmatprep.subr.mxu0 0.0
        %816 = vmatpush1.msra.mxu0 0.0
        %817 = vmatprep.subr.mxu0 0.0
        %818 = vmatpush1.msra.mxu0 0.0
        %819 = vmatprep.subr.mxu0 0.0
        %820 = vmatpush1.msra.mxu0 0.0
        %821 = vmatprep.subr.mxu0 0.0
        %822 = vmatpush1.msra.mxu0 0.0
        %823 = vmatprep.subr.mxu0 0.0
        %824 = vmatpush1.msra.mxu0 0.0
        %825 = vmatprep.subr.mxu0 0.0
        %826 = vmatpush1.msra.mxu0 0.0
        %827 = vmatprep.subr.mxu0 0.0
        %828 = vmatpush1.msra.mxu0 0.0
        %829 = vmatprep.subr.mxu0 0.0
        %830 = vmatpush1.msra.mxu0 0.0
        %831 = vmatprep.subr.mxu0 0.0
        %832 = vmatpush1.msra.mxu0 0.0
        %833 = vmatprep.subr.mxu0 0.0
        %834 = vmatpush1.msra.mxu0 0.0
        %835 = vmatprep.mubr.f32.mxu0 0.0
        %836 = vmatmul.mubr.f32.gmra.mrb[0].mxu0 %v770
        %v837 = vpop.f32.mrb[0].mxu0
        %v838 = vadd.f32 0.0, %v837
        %v839 = vpop.f32.mrb[0].mxu0
        %v840 = vadd.f32 0.0, %v839
        %841 = vdwg.mxu0
        %842 = vmatprep.subr.mxu0 0.0
        %843 = vmatpush1.msra.mxu0 %v555
        %844 = vmatprep.subr.mxu0 0.0
        %845 = vmatpush1.msra.mxu0 %v558
        %846 = vmatprep.subr.mxu0 0.0
        %847 = vmatpush1.msra.mxu0 %v561
        %848 = vmatprep.subr.mxu0 0.0
        %849 = vmatpush1.msra.mxu0 %v564
        %850 = vmatprep.subr.mxu0 0.0
        %851 = vmatpush1.msra.mxu0 %v567
        %852 = vmatprep.subr.mxu0 0.0
        %853 = vmatpush1.msra.mxu0 %v570
        %854 = vmatprep.subr.mxu0 0.0
        %855 = vmatpush1.msra.mxu0 %v573
        %856 = vmatprep.subr.mxu0 0.0
        %857 = vmatpush1.msra.mxu0 %v576
        %858 = vmatprep.subr.mxu0 0.0
        %859 = vmatpush1.msra.mxu0 %v579
        %860 = vmatprep.subr.mxu0 0.0
        %861 = vmatpush1.msra.mxu0 %v582
        %862 = vmatprep.subr.mxu0 0.0
        %863 = vmatpush1.msra.mxu0 %v585
        %864 = vmatprep.subr.mxu0 0.0
        %865 = vmatpush1.msra.mxu0 %v588
        %866 = vmatprep.subr.mxu0 0.0
        %867 = vmatpush1.msra.mxu0 %v591
        %868 = vmatprep.subr.mxu0 0.0
        %869 = vmatpush1.msra.mxu0 %v594
        %870 = vmatprep.subr.mxu0 0.0
        %871 = vmatpush1.msra.mxu0 %v597
        %872 = vmatprep.subr.mxu0 0.0
        %873 = vmatpush1.msra.mxu0 %v600
        %874 = vmatprep.subr.mxu0 0.0
        %875 = vmatpush1.msra.mxu0 0.0
        %876 = vmatprep.subr.mxu0 0.0
        %877 = vmatpush1.msra.mxu0 0.0
        %878 = vmatprep.subr.mxu0 0.0
        %879 = vmatpush1.msra.mxu0 0.0
        %880 = vmatprep.subr.mxu0 0.0
        %881 = vmatpush1.msra.mxu0 0.0
        %882 = vmatprep.subr.mxu0 0.0
        %883 = vmatpush1.msra.mxu0 0.0
        %884 = vmatprep.subr.mxu0 0.0
        %885 = vmatpush1.msra.mxu0 0.0
        %886 = vmatprep.subr.mxu0 0.0
        %887 = vmatpush1.msra.mxu0 0.0
        %888 = vmatprep.subr.mxu0 0.0
        %889 = vmatpush1.msra.mxu0 0.0
        %890 = vmatprep.subr.mxu0 0.0
        %891 = vmatpush1.msra.mxu0 0.0
        %892 = vmatprep.subr.mxu0 0.0
        %893 = vmatpush1.msra.mxu0 0.0
        %894 = vmatprep.subr.mxu0 0.0
        %895 = vmatpush1.msra.mxu0 0.0
        %896 = vmatprep.subr.mxu0 0.0
        %897 = vmatpush1.msra.mxu0 0.0
        %898 = vmatprep.subr.mxu0 0.0
        %899 = vmatpush1.msra.mxu0 0.0
        %900 = vmatprep.subr.mxu0 0.0
        %901 = vmatpush1.msra.mxu0 0.0
        %902 = vmatprep.subr.mxu0 0.0
        %903 = vmatpush1.msra.mxu0 0.0
        %904 = vmatprep.subr.mxu0 0.0
        %905 = vmatpush1.msra.mxu0 0.0
        %906 = vmatprep.mubr.f32.mxu0 0.0
        %907 = vmatmul.mubr.f32.gmra.mrb[0].mxu0 %v770
        %v908 = vpop.f32.mrb[0].mxu0
        %v909 = vadd.f32 0.0, %v908
        %v910 = vpop.f32.mrb[0].mxu0
        %911 = vdwg.mxu0
        %v912 = vadd.f32 %v452, %v838
        %v913 = vxor.u32 %v912, 2147483648
        %v914 = vmul.f32 %v913, 1.442695
        %v915 = vpow.pop %v914
        %v916 = vadd.f32 %v915, 1.0
        %v917 = vrcp.pop %v916
        %v918 = vmul.f32 1.0, %v917
        %v919 = vadd.f32 %v454, %v840
        %v920 = vxor.u32 %v919, 2147483648
        %v921 = vmul.f32 %v920, 1.442695
        %v922 = vpow.pop %v921
        %v923 = vadd.f32 %v922, 1.0
        %v924 = vrcp.pop %v923
        %v925 = vmul.f32 1.0, %v924
        %v926 = vadd.f32 %v909, %v762
        %v927 = vmul.f32 %v918, %v926
        %v928 = vadd.f32 %v540, %v927
        %v929 = vtanh.pop %v928
        %v930 = vsub.f32 %v770, %v929
        %v931 = vmul.f32 %v925, %v930
        %v932 = vadd.f32 %v929, %v931
        %933 = vmatprep.subr.mxu0 %v554
        %934 = vmatpush1.msra.mxu0 %v553
        %935 = vmatprep.subr.mxu0 %v557
        %936 = vmatpush1.msra.mxu0 %v556
        %937 = vmatprep.subr.mxu0 %v560
        %938 = vmatpush1.msra.mxu0 %v559
        %939 = vmatprep.subr.mxu0 %v563
        %940 = vmatpush1.msra.mxu0 %v562
        %941 = vmatprep.subr.mxu0 %v566
        %942 = vmatpush1.msra.mxu0 %v565
        %943 = vmatprep.subr.mxu0 %v569
        %944 = vmatpush1.msra.mxu0 %v568
        %945 = vmatprep.subr.mxu0 %v572
        %946 = vmatpush1.msra.mxu0 %v571
        %947 = vmatprep.subr.mxu0 %v575
        %948 = vmatpush1.msra.mxu0 %v574
        %949 = vmatprep.subr.mxu0 %v578
        %950 = vmatpush1.msra.mxu0 %v577
        %951 = vmatprep.subr.mxu0 %v581
        %952 = vmatpush1.msra.mxu0 %v580
        %953 = vmatprep.subr.mxu0 %v584
        %954 = vmatpush1.msra.mxu0 %v583
        %955 = vmatprep.subr.mxu0 %v587
        %956 = vmatpush1.msra.mxu0 %v586
        %957 = vmatprep.subr.mxu0 %v590
        %958 = vmatpush1.msra.mxu0 %v589
        %959 = vmatprep.subr.mxu0 %v593
        %960 = vmatpush1.msra.mxu0 %v592
        %961 = vmatprep.subr.mxu0 %v596
        %962 = vmatpush1.msra.mxu0 %v595
        %963 = vmatprep.subr.mxu0 %v599
        %964 = vmatpush1.msra.mxu0 %v598
        %965 = vmatprep.subr.mxu0 0.0
        %966 = vmatpush1.msra.mxu0 0.0
        %967 = vmatprep.subr.mxu0 0.0
        %968 = vmatpush1.msra.mxu0 0.0
        %969 = vmatprep.subr.mxu0 0.0
        %970 = vmatpush1.msra.mxu0 0.0
        %971 = vmatprep.subr.mxu0 0.0
        %972 = vmatpush1.msra.mxu0 0.0
        %973 = vmatprep.subr.mxu0 0.0
        %974 = vmatpush1.msra.mxu0 0.0
        %975 = vmatprep.subr.mxu0 0.0
        %976 = vmatpush1.msra.mxu0 0.0
        %977 = vmatprep.subr.mxu0 0.0
        %978 = vmatpush1.msra.mxu0 0.0
        %979 = vmatprep.subr.mxu0 0.0
        %980 = vmatpush1.msra.mxu0 0.0
        %981 = vmatprep.subr.mxu0 0.0
        %982 = vmatpush1.msra.mxu0 0.0
        %983 = vmatprep.subr.mxu0 0.0
        %984 = vmatpush1.msra.mxu0 0.0
        %985 = vmatprep.subr.mxu0 0.0
        %986 = vmatpush1.msra.mxu0 0.0
        %987 = vmatprep.subr.mxu0 0.0
        %988 = vmatpush1.msra.mxu0 0.0
        %989 = vmatprep.subr.mxu0 0.0
        %990 = vmatpush1.msra.mxu0 0.0
        %991 = vmatprep.subr.mxu0 0.0
        %992 = vmatpush1.msra.mxu0 0.0
        %993 = vmatprep.subr.mxu0 0.0
        %994 = vmatpush1.msra.mxu0 0.0
        %995 = vmatprep.subr.mxu0 0.0
        %996 = vmatpush1.msra.mxu0 0.0
        %997 = vmatprep.mubr.f32.mxu0 0.0
        %998 = vmatmul.mubr.f32.gmra.mrb[0].mxu0 %v932
        %v999 = vpop.f32.mrb[0].mxu0
        %v1000 = vadd.f32 0.0, %v999
        %v1001 = vpop.f32.mrb[0].mxu0
        %v1002 = vadd.f32 0.0, %v1001
        %1003 = vdwg.mxu0
        %1004 = vmatprep.subr.mxu0 0.0
        %1005 = vmatpush1.msra.mxu0 %v555
        %1006 = vmatprep.subr.mxu0 0.0
        %1007 = vmatpush1.msra.mxu0 %v558
        %1008 = vmatprep.subr.mxu0 0.0
        %1009 = vmatpush1.msra.mxu0 %v561
        %1010 = vmatprep.subr.mxu0 0.0
        %1011 = vmatpush1.msra.mxu0 %v564
        %1012 = vmatprep.subr.mxu0 0.0
        %1013 = vmatpush1.msra.mxu0 %v567
        %1014 = vmatprep.subr.mxu0 0.0
        %1015 = vmatpush1.msra.mxu0 %v570
        %1016 = vmatprep.subr.mxu0 0.0
        %1017 = vmatpush1.msra.mxu0 %v573
        %1018 = vmatprep.subr.mxu0 0.0
        %1019 = vmatpush1.msra.mxu0 %v576
        %1020 = vmatprep.subr.mxu0 0.0
        %1021 = vmatpush1.msra.mxu0 %v579
        %1022 = vmatprep.subr.mxu0 0.0
        %1023 = vmatpush1.msra.mxu0 %v582
        %1024 = vmatprep.subr.mxu0 0.0
        %1025 = vmatpush1.msra.mxu0 %v585
        %1026 = vmatprep.subr.mxu0 0.0
        %1027 = vmatpush1.msra.mxu0 %v588
        %1028 = vmatprep.subr.mxu0 0.0
        %1029 = vmatpush1.msra.mxu0 %v591
        %1030 = vmatprep.subr.mxu0 0.0
        %1031 = vmatpush1.msra.mxu0 %v594
        %1032 = vmatprep.subr.mxu0 0.0
        %1033 = vmatpush1.msra.mxu0 %v597
        %1034 = vmatprep.subr.mxu0 0.0
        %1035 = vmatpush1.msra.mxu0 %v600
        %1036 = vmatprep.subr.mxu0 0.0
        %1037 = vmatpush1.msra.mxu0 0.0
        %1038 = vmatprep.subr.mxu0 0.0
        %1039 = vmatpush1.msra.mxu0 0.0
        %1040 = vmatprep.subr.mxu0 0.0
        %1041 = vmatpush1.msra.mxu0 0.0
        %1042 = vmatprep.subr.mxu0 0.0
        %1043 = vmatpush1.msra.mxu0 0.0
        %1044 = vmatprep.subr.mxu0 0.0
        %1045 = vmatpush1.msra.mxu0 0.0
        %1046 = vmatprep.subr.mxu0 0.0
        %1047 = vmatpush1.msra.mxu0 0.0
        %1048 = vmatprep.subr.mxu0 0.0
        %1049 = vmatpush1.msra.mxu0 0.0
        %1050 = vmatprep.subr.mxu0 0.0
        %1051 = vmatpush1.msra.mxu0 0.0
        %1052 = vmatprep.subr.mxu0 0.0
        %1053 = vmatpush1.msra.mxu0 0.0
        %1054 = vmatprep.subr.mxu0 0.0
        %1055 = vmatpush1.msra.mxu0 0.0
        %1056 = vmatprep.subr.mxu0 0.0
        %1057 = vmatpush1.msra.mxu0 0.0
        %1058 = vmatprep.subr.mxu0 0.0
        %1059 = vmatpush1.msra.mxu0 0.0
        %1060 = vmatprep.subr.mxu0 0.0
        %1061 = vmatpush1.msra.mxu0 0.0
        %1062 = vmatprep.subr.mxu0 0.0
        %1063 = vmatpush1.msra.mxu0 0.0
        %1064 = vmatprep.subr.mxu0 0.0
        %1065 = vmatpush1.msra.mxu0 0.0
        %1066 = vmatprep.subr.mxu0 0.0
        %1067 = vmatpush1.msra.mxu0 0.0
        %1068 = vmatprep.mubr.f32.mxu0 0.0
        %1069 = vmatmul.mubr.f32.gmra.mrb[0].mxu0 %v932
        %v1070 = vpop.f32.mrb[0].mxu0
        %v1071 = vadd.f32 0.0, %v1070
        %v1072 = vpop.f32.mrb[0].mxu0
        %1073 = vdwg.mxu0
        %v1074 = vadd.f32 %v458, %v1000
        %v1075 = vxor.u32 %v1074, 2147483648
        %v1076 = vmul.f32 %v1075, 1.442695
        %v1077 = vpow.pop %v1076
        %v1078 = vadd.f32 %v1077, 1.0
        %v1079 = vrcp.pop %v1078
        %v1080 = vmul.f32 1.0, %v1079
        %v1081 = vadd.f32 %v460, %v1002
        %v1082 = vxor.u32 %v1081, 2147483648
        %v1083 = vmul.f32 %v1082, 1.442695
        %v1084 = vpow.pop %v1083
        %v1085 = vadd.f32 %v1084, 1.0
        %v1086 = vrcp.pop %v1085
        %v1087 = vmul.f32 1.0, %v1086
        %v1088 = vadd.f32 %v1071, %v762
        %v1089 = vmul.f32 %v1080, %v1088
        %v1090 = vadd.f32 %v545, %v1089
        %v1091 = vtanh.pop %v1090
        %v1092 = vsub.f32 %v932, %v1091
        %v1093 = vmul.f32 %v1087, %v1092
        %v1094 = vadd.f32 %v1091, %v1093
        %1095 = vmatprep.subr.mxu0 %v554
        %1096 = vmatpush1.msra.mxu0 %v553
        %1097 = vmatprep.subr.mxu0 %v557
        %1098 = vmatpush1.msra.mxu0 %v556
        %1099 = vmatprep.subr.mxu0 %v560
        %1100 = vmatpush1.msra.mxu0 %v559
        %1101 = vmatprep.subr.mxu0 %v563
        %1102 = vmatpush1.msra.mxu0 %v562
        %1103 = vmatprep.subr.mxu0 %v566
        %1104 = vmatpush1.msra.mxu0 %v565
        %1105 = vmatprep.subr.mxu0 %v569
        %1106 = vmatpush1.msra.mxu0 %v568
        %1107 = vmatprep.subr.mxu0 %v572
        %1108 = vmatpush1.msra.mxu0 %v571
        %1109 = vmatprep.subr.mxu0 %v575
        %1110 = vmatpush1.msra.mxu0 %v574
        %1111 = vmatprep.subr.mxu0 %v578
        %1112 = vmatpush1.msra.mxu0 %v577
        %1113 = vmatprep.subr.mxu0 %v581
        %1114 = vmatpush1.msra.mxu0 %v580
        %1115 = vmatprep.subr.mxu0 %v584
        %1116 = vmatpush1.msra.mxu0 %v583
        %1117 = vmatprep.subr.mxu0 %v587
        %1118 = vmatpush1.msra.mxu0 %v586
        %1119 = vmatprep.subr.mxu0 %v590
        %1120 = vmatpush1.msra.mxu0 %v589
        %1121 = vmatprep.subr.mxu0 %v593
        %1122 = vmatpush1.msra.mxu0 %v592
        %1123 = vmatprep.subr.mxu0 %v596
        %1124 = vmatpush1.msra.mxu0 %v595
        %1125 = vmatprep.subr.mxu0 %v599
        %1126 = vmatpush1.msra.mxu0 %v598
        %1127 = vmatprep.subr.mxu0 0.0
        %1128 = vmatpush1.msra.mxu0 0.0
        %1129 = vmatprep.subr.mxu0 0.0
        %1130 = vmatpush1.msra.mxu0 0.0
        %1131 = vmatprep.subr.mxu0 0.0
        %1132 = vmatpush1.msra.mxu0 0.0
        %1133 = vmatprep.subr.mxu0 0.0
        %1134 = vmatpush1.msra.mxu0 0.0
        %1135 = vmatprep.subr.mxu0 0.0
        %1136 = vmatpush1.msra.mxu0 0.0
        %1137 = vmatprep.subr.mxu0 0.0
        %1138 = vmatpush1.msra.mxu0 0.0
        %1139 = vmatprep.subr.mxu0 0.0
        %1140 = vmatpush1.msra.mxu0 0.0
        %1141 = vmatprep.subr.mxu0 0.0
        %1142 = vmatpush1.msra.mxu0 0.0
        %1143 = vmatprep.subr.mxu0 0.0
        %1144 = vmatpush1.msra.mxu0 0.0
        %1145 = vmatprep.subr.mxu0 0.0
        %1146 = vmatpush1.msra.mxu0 0.0
        %1147 = vmatprep.subr.mxu0 0.0
        %1148 = vmatpush1.msra.mxu0 0.0
        %1149 = vmatprep.subr.mxu0 0.0
        %1150 = vmatpush1.msra.mxu0 0.0
        %1151 = vmatprep.subr.mxu0 0.0
        %1152 = vmatpush1.msra.mxu0 0.0
        %1153 = vmatprep.subr.mxu0 0.0
        %1154 = vmatpush1.msra.mxu0 0.0
        %1155 = vmatprep.subr.mxu0 0.0
        %1156 = vmatpush1.msra.mxu0 0.0
        %1157 = vmatprep.subr.mxu0 0.0
        %1158 = vmatpush1.msra.mxu0 0.0
        %1159 = vmatprep.mubr.f32.mxu0 0.0
        %1160 = vmatmul.mubr.f32.gmra.mrb[0].mxu0 %v1094
        %v1161 = vpop.f32.mrb[0].mxu0
        %v1162 = vadd.f32 0.0, %v1161
        %v1163 = vpop.f32.mrb[0].mxu0
        %v1164 = vadd.f32 0.0, %v1163
        %1165 = vdwg.mxu0
        %1166 = vmatprep.subr.mxu0 0.0
        %1167 = vmatpush1.msra.mxu0 %v555
        %1168 = vmatprep.subr.mxu0 0.0
        %1169 = vmatpush1.msra.mxu0 %v558
        %1170 = vmatprep.subr.mxu0 0.0
        %1171 = vmatpush1.msra.mxu0 %v561
        %1172 = vmatprep.subr.mxu0 0.0
        %1173 = vmatpush1.msra.mxu0 %v564
        %1174 = vmatprep.subr.mxu0 0.0
        %1175 = vmatpush1.msra.mxu0 %v567
        %1176 = vmatprep.subr.mxu0 0.0
        %1177 = vmatpush1.msra.mxu0 %v570
        %1178 = vmatprep.subr.mxu0 0.0
        %1179 = vmatpush1.msra.mxu0 %v573
        %1180 = vmatprep.subr.mxu0 0.0
        %1181 = vmatpush1.msra.mxu0 %v576
        %1182 = vmatprep.subr.mxu0 0.0
        %1183 = vmatpush1.msra.mxu0 %v579
        %1184 = vmatprep.subr.mxu0 0.0
        %1185 = vmatpush1.msra.mxu0 %v582
        %1186 = vmatprep.subr.mxu0 0.0
        %1187 = vmatpush1.msra.mxu0 %v585
        %1188 = vmatprep.subr.mxu0 0.0
        %1189 = vmatpush1.msra.mxu0 %v588
        %1190 = vmatprep.subr.mxu0 0.0
        %1191 = vmatpush1.msra.mxu0 %v591
        %1192 = vmatprep.subr.mxu0 0.0
        %1193 = vmatpush1.msra.mxu0 %v594
        %1194 = vmatprep.subr.mxu0 0.0
        %1195 = vmatpush1.msra.mxu0 %v597
        %1196 = vmatprep.subr.mxu0 0.0
        %1197 = vmatpush1.msra.mxu0 %v600
        %1198 = vmatprep.subr.mxu0 0.0
        %1199 = vmatpush1.msra.mxu0 0.0
        %1200 = vmatprep.subr.mxu0 0.0
        %1201 = vmatpush1.msra.mxu0 0.0
        %1202 = vmatprep.subr.mxu0 0.0
        %1203 = vmatpush1.msra.mxu0 0.0
        %1204 = vmatprep.subr.mxu0 0.0
        %1205 = vmatpush1.msra.mxu0 0.0
        %1206 = vmatprep.subr.mxu0 0.0
        %1207 = vmatpush1.msra.mxu0 0.0
        %1208 = vmatprep.subr.mxu0 0.0
        %1209 = vmatpush1.msra.mxu0 0.0
        %1210 = vmatprep.subr.mxu0 0.0
        %1211 = vmatpush1.msra.mxu0 0.0
        %1212 = vmatprep.subr.mxu0 0.0
        %1213 = vmatpush1.msra.mxu0 0.0
        %1214 = vmatprep.subr.mxu0 0.0
        %1215 = vmatpush1.msra.mxu0 0.0
        %1216 = vmatprep.subr.mxu0 0.0
        %1217 = vmatpush1.msra.mxu0 0.0
        %1218 = vmatprep.subr.mxu0 0.0
        %1219 = vmatpush1.msra.mxu0 0.0
        %1220 = vmatprep.subr.mxu0 0.0
        %1221 = vmatpush1.msra.mxu0 0.0
        %1222 = vmatprep.subr.mxu0 0.0
        %1223 = vmatpush1.msra.mxu0 0.0
        %1224 = vmatprep.subr.mxu0 0.0
        %1225 = vmatpush1.msra.mxu0 0.0
        %1226 = vmatprep.subr.mxu0 0.0
        %1227 = vmatpush1.msra.mxu0 0.0
        %1228 = vmatprep.subr.mxu0 0.0
        %1229 = vmatpush1.msra.mxu0 0.0
        %1230 = vmatprep.mubr.f32.mxu0 0.0
        %1231 = vmatmul.mubr.f32.gmra.mrb[0].mxu0 %v1094
        %v1232 = vpop.f32.mrb[0].mxu0
        %v1233 = vadd.f32 0.0, %v1232
        %v1234 = vpop.f32.mrb[0].mxu0
        %1235 = vdwg.mxu0
        %v1236 = vadd.f32 %v464, %v1162
        %v1237 = vxor.u32 %v1236, 2147483648
        %v1238 = vmul.f32 %v1237, 1.442695
        %v1239 = vpow.pop %v1238
        %v1240 = vadd.f32 %v1239, 1.0
        %v1241 = vrcp.pop %v1240
        %v1242 = vmul.f32 1.0, %v1241
        %v1243 = vadd.f32 %v466, %v1164
        %v1244 = vxor.u32 %v1243, 2147483648
        %v1245 = vmul.f32 %v1244, 1.442695
        %v1246 = vpow.pop %v1245
        %v1247 = vadd.f32 %v1246, 1.0
        %v1248 = vrcp.pop %v1247
        %v1249 = vmul.f32 1.0, %v1248
        %v1250 = vadd.f32 %v1233, %v762
        %v1251 = vmul.f32 %v1242, %v1250
        %v1252 = vadd.f32 %v550, %v1251
        %v1253 = vtanh.pop %v1252
        %v1254 = vsub.f32 %v1094, %v1253
        %v1255 = vmul.f32 %v1249, %v1254
        %v1256 = vadd.f32 %v1253, %v1255
        %1257 = vst [vmem:[#allocation2] sm:$0xff] %v1256
        %p1258 = scmp.eq.s32.totalorder %s26, 1
        // Predicated region
        $region61: #{tpu_custom_call.1} parent=47 // pred_check
          %p1259 = pneg %p1258
        $region62: #{tpu_custom_call.1} parent=47 // pred_check_branch
          %1261 = sbr.rel (%p1259) target = $region64
        $region63: #{tpu_custom_call.1} parent=47 // pred_region
          %v1262 = vld [vmem:[#allocation6] sm:$0xff]
          %v1263 = vld [vmem:[#allocation6 + $0x8] sm:$0xff]
          %v1264 = vld [vmem:[#allocation6 + $0x10] sm:$0xff]
          %v1265 = vld [vmem:[#allocation6 + $0x18] sm:$0xff]
          %v1266 = vld [vmem:[#allocation6 + $0x20] sm:$0xff]
          %v1267 = vld [vmem:[#allocation6 + $0x28] sm:$0xff]
          %v1268 = vld [vmem:[#allocation6 + $0x30] sm:$0xff]
          %v1269 = vld [vmem:[#allocation6 + $0x38] sm:$0xff]
          %v1270 = vld [vmem:[#allocation6 + $0x40] sm:$0xff]
          %v1271 = vld [vmem:[#allocation6 + $0x48] sm:$0xff]
          %v1272 = vld [vmem:[#allocation6 + $0x50] sm:$0xff]
          %v1273 = vld [vmem:[#allocation6 + $0x58] sm:$0xff]
          %v1274 = vld [vmem:[#allocation6 + $0x60] sm:$0xff]
          %v1275 = vld [vmem:[#allocation6 + $0x68] sm:$0xff]
          %v1276 = vld [vmem:[#allocation6 + $0x70] sm:$0xff]
          %v1277 = vld [vmem:[#allocation6 + $0x78] sm:$0xff]
          %v1278 = vld [vmem:[%s6] sm:$0x1]
          %v1280 = vlaneseq
          %v1281 = vshrl.u32 %v1280, 7
          %v1282 = vsub.s32 0, %v1281
          %v1283 = vrot.slane %v1278, %v1282
          %1285 = vmatprep.subr.mxu0 0.0
          %1286 = vmatpush1.msra.mxu0 %v1262
          %1287 = vmatprep.subr.mxu0 0.0
          %1288 = vmatpush1.msra.mxu0 %v1263
          %1289 = vmatprep.subr.mxu0 0.0
          %1290 = vmatpush1.msra.mxu0 %v1264
          %1291 = vmatprep.subr.mxu0 0.0
          %1292 = vmatpush1.msra.mxu0 %v1265
          %1293 = vmatprep.subr.mxu0 0.0
          %1294 = vmatpush1.msra.mxu0 %v1266
          %1295 = vmatprep.subr.mxu0 0.0
          %1296 = vmatpush1.msra.mxu0 %v1267
          %1297 = vmatprep.subr.mxu0 0.0
          %1298 = vmatpush1.msra.mxu0 %v1268
          %1299 = vmatprep.subr.mxu0 0.0
          %1300 = vmatpush1.msra.mxu0 %v1269
          %1301 = vmatprep.subr.mxu0 0.0
          %1302 = vmatpush1.msra.mxu0 %v1270
          %1303 = vmatprep.subr.mxu0 0.0
          %1304 = vmatpush1.msra.mxu0 %v1271
          %1305 = vmatprep.subr.mxu0 0.0
          %1306 = vmatpush1.msra.mxu0 %v1272
          %1307 = vmatprep.subr.mxu0 0.0
          %1308 = vmatpush1.msra.mxu0 %v1273
          %1309 = vmatprep.subr.mxu0 0.0
          %1310 = vmatpush1.msra.mxu0 %v1274
          %1311 = vmatprep.subr.mxu0 0.0
          %1312 = vmatpush1.msra.mxu0 %v1275
          %1313 = vmatprep.subr.mxu0 0.0
          %1314 = vmatpush1.msra.mxu0 %v1276
          %1315 = vmatprep.subr.mxu0 0.0
          %1316 = vmatpush1.msra.mxu0 %v1277
          %1317 = vmatprep.subr.mxu0 0.0
          %1318 = vmatpush1.msra.mxu0 0.0
          %1319 = vmatprep.subr.mxu0 0.0
          %1320 = vmatpush1.msra.mxu0 0.0
          %1321 = vmatprep.subr.mxu0 0.0
          %1322 = vmatpush1.msra.mxu0 0.0
          %1323 = vmatprep.subr.mxu0 0.0
          %1324 = vmatpush1.msra.mxu0 0.0
          %1325 = vmatprep.subr.mxu0 0.0
          %1326 = vmatpush1.msra.mxu0 0.0
          %1327 = vmatprep.subr.mxu0 0.0
          %1328 = vmatpush1.msra.mxu0 0.0
          %1329 = vmatprep.subr.mxu0 0.0
          %1330 = vmatpush1.msra.mxu0 0.0
          %1331 = vmatprep.subr.mxu0 0.0
          %1332 = vmatpush1.msra.mxu0 0.0
          %1333 = vmatprep.subr.mxu0 0.0
          %1334 = vmatpush1.msra.mxu0 0.0
          %1335 = vmatprep.subr.mxu0 0.0
          %1336 = vmatpush1.msra.mxu0 0.0
          %1337 = vmatprep.subr.mxu0 0.0
          %1338 = vmatpush1.msra.mxu0 0.0
          %1339 = vmatprep.subr.mxu0 0.0
          %1340 = vmatpush1.msra.mxu0 0.0
          %1341 = vmatprep.subr.mxu0 0.0
          %1342 = vmatpush1.msra.mxu0 0.0
          %1343 = vmatprep.subr.mxu0 0.0
          %1344 = vmatpush1.msra.mxu0 0.0
          %1345 = vmatprep.subr.mxu0 0.0
          %1346 = vmatpush1.msra.mxu0 0.0
          %1347 = vmatprep.subr.mxu0 0.0
          %1348 = vmatpush1.msra.mxu0 0.0
          %1349 = vmatprep.mubr.f32.mxu0 0.0
          %1350 = vmatmul.mubr.f32.gmra.mrb[0].mxu0 %v1256
          %v1351 = vpop.f32.mrb[0].mxu0
          %v1352 = vadd.f32 %v1283, %v1351
          %v1353 = vpop.f32.mrb[0].mxu0
          %1354 = vdwg.mxu0
          %1355 = vst [vmem:[#allocation8] sm:$0xff] %v1352
        $region64: #{tpu_custom_call.1} parent=47 // pred_fallthru
          _
        // Predicated region
        $region65: #{tpu_custom_call.1} parent=47 // pred_check
          %p1356 = pneg %p205
        $region66: #{tpu_custom_call.1} parent=47 // pred_check_branch
          %1358 = sbr.rel (%p1356) target = $region68
        $region67: #{tpu_custom_call.1} parent=47 // pred_region
          %s1360 = ssub.s32 128, 128
          %1361 = vsyncadd [#allocation5], %s1360
          %s1362 = smul.addr %s25, 128
          %s1363 = scalar_lea.hbm %s7, %s1362
          %s1365 = sshll.u32 [#allocation8], 4
          %s1366 = int_to_ptr.vmem [resolvable:$true] %s1365
          %1368 = dma.vmem_to_hbm [thread:$0]  %s1366, 128, %s1363, [#allocation5]
        $region68: #{tpu_custom_call.1} parent=47 // pred_fallthru
          _
        // Predicated region
        $region69: #{tpu_custom_call.1} parent=47 // pred_check
          %p1369 = pneg %p205
        $region70: #{tpu_custom_call.1} parent=47 // pred_check_branch
          %1371 = sbr.rel (%p1369) target = $region72
        $region71: #{tpu_custom_call.1} parent=47 // pred_region
          %1372 = dma.done [#allocation5], 128
        $region72: #{tpu_custom_call.1} parent=47 // pred_fallthru
          _
      $region48: #{tpu_custom_call.1} parent=5 // pred_fallthru
        _
      %p1373 = scmp.le.s32.totalorder 2, %s16
      // Predicated region
      $region73: #{tpu_custom_call.1} parent=5 // pred_check
        %p1374 = pneg %p1373
      $region74: #{tpu_custom_call.1} parent=5 // pred_check_branch
        %1376 = sbr.rel (%p1374) target = $region76
      $region75: #{tpu_custom_call.1} parent=5 // pred_region
        %s1377 = ssub.s32 %s16, 2
      $region76: #{tpu_custom_call.1} parent=5 // pred_fallthru
        _
    $region6: #{tpu_custom_call.1} parent=1 // loop_footer
      %s20 = sadd.s32 1, %s16
    $region7: #{tpu_custom_call.1} parent=1 // loop_footer_branch
      %15 = sbr.rel target = $region3
    $region8: #{tpu_custom_call.1} parent=1 // loop_exit
      _
    %1378 = vsyncpa [#allocation4], 1
    %s1379 = scalar_lea.sflag [#allocation4], 1
    %1380 = vsyncpa %s1379, 1
    %1381 = vsyncpa [#allocation7], 1
    %1382 = vsyncpa [#allocation5], 1
    %s1383 = scalar_lea.sflag [#allocation5], 1
    %1384 = vsyncpa %s1383, 1

</llo_original>
